<compile_context>
chip_gen: v7x
topology: tpu7x:2x2x1
jax: 0.10.0
libtpu: 0.0.40
codegen_flags: <defaults>
</compile_context>

<pallas_src>
import math
import numpy as np
import jax
import jax.numpy as jnp
from jax import lax
from jax.experimental import pallas as pl
from jax.experimental.pallas import tpu as pltpu

# Gaussian 1-D taps for window=3, sigma=1.5 (kornia get_gaussian_kernel1d,
# normalized to sum 1): [K0, K1, K0].
_G = math.exp(-1.0 / (2.0 * 1.5 * 1.5))
K0 = _G / (1.0 + 2.0 * _G)   # outer taps
K1 = 1.0 / (1.0 + 2.0 * _G)  # center tap

_LANE = 128                       # vreg lane width / safe MXU contraction tile
_HIGHEST = lax.Precision.HIGHEST


# --------------------------------------------------------------------------
# Trace-time (numpy, float64) construction of the folded matrices.
# --------------------------------------------------------------------------
def _bilinear_matrix(in_size: int, scale: int) -> np.ndarray:
    """(scale*in, in) matrix for torch bilinear upsampling, align_corners=False."""
    out_size = in_size * scale
    o = np.arange(out_size, dtype=np.float64)
    src = (o + 0.5) * (in_size / out_size) - 0.5
    src = np.clip(src, 0.0, None)
    i0 = np.minimum(np.floor(src).astype(np.int64), in_size - 1)
    i1 = np.minimum(i0 + 1, in_size - 1)
    wgt = src - i0
    m = np.zeros((out_size, in_size), dtype=np.float64)
    m[np.arange(out_size), i0] += (1.0 - wgt)
    m[np.arange(out_size), i1] += wgt
    return m


def _blur_band_matrix(n: int) -> np.ndarray:
    """(n, n) band matrix for a 3-tap [K0, K1, K0] blur with reflect padding."""
    g = np.zeros((n, n), dtype=np.float64)
    for i in range(n):
        for off, kk in ((-1, K0), (0, K1), (1, K0)):
            j = i + off
            if j < 0:
                j = -j                      # reflect: index -1 -> 1
            elif j > n - 1:
                j = 2 * (n - 1) - j         # reflect: index n -> n-2
            g[i, j] += kk
    return g


# --------------------------------------------------------------------------
# Batch-size heuristics.
# --------------------------------------------------------------------------
def _choose_packed_batch(nc: int, w: int, s: int) -> int:
    """Channel planes interleaved along the lane axis per grid step (s*w < 128).

    Constraints / targets (perf feedback):
      * bch*w <= 128 : second matmul's contraction stays within one MXU
        contraction tile, so the block-diagonal zero blocks cost nothing.
      * bch*s*w >= 128 (and bch*w -> 128): lane-dense output stores and a
        densely packed intermediate slab.
      * Microscopic totals -> one grid step (per-step overhead dominates);
        otherwise keep >= 8 grid steps for pipelining / megacore.
    """
    divisors = [d for d in range(1, nc + 1) if nc % d == 0]
    capped = [d for d in divisors if d * w <= _LANE] or [1]
    if nc * w <= _LANE:            # whole problem packs into <= one slab: g == 1
        return capped[-1]
    for min_steps in (8, 4, 2, 1):
        ok = [d for d in capped if nc // d >= min_steps and d * s * w >= _LANE]
        if ok:
            return ok[-1]          # largest -> bch*w closest to one MXU tile
    return capped[-1]


def _choose_plane_batch(nc: int, h: int, w: int, s: int,
                        vmem_budget: int = 8 << 20) -> int:
    """Planes per grid step for the already-lane-dense (s*w >= 128) path."""
    per_plane = 2 * 4 * (h * w + (s * h) * (s * w))   # f32 in+out, double-buffered
    max_b = max(1, vmem_budget // per_plane)
    divisors = [d for d in range(1, nc + 1) if nc % d == 0 and d <= max_b] or [1]
    for min_steps in (8, 4, 2, 1):
        ok = [d for d in divisors if nc // d >= min_steps]
        if ok:
            return ok[-1]
    return divisors[-1]


# --------------------------------------------------------------------------
# Kernels.
# --------------------------------------------------------------------------
def _packed_kernel(x_ref, ah_ref, rbd_ref, o_ref):
    # x slab: bch channel planes interleaved along the lane dim -> (H, bch*W).
    x = x_ref[0].astype(jnp.float32)
    # H-direction blur+upsample: (sH, H) @ (H, bch*W) -> (sH, bch*W).
    t = jnp.dot(ah_ref[...], x, precision=_HIGHEST,
                preferred_element_type=jnp.float32)
    # W-direction blur+upsample (block-diagonal over the channel batch, with
    # bch*W <= 128 the whole contraction is a single MXU tile -> zeros free):
    # (sH, bch*W) @ (bch*W, bch*sW) -> (sH, bch*sW)  -- lane-dense output slab.
    y = jnp.dot(t, rbd_ref[...], precision=_HIGHEST,
                preferred_element_type=jnp.float32)
    o_ref[0] = y.astype(o_ref.dtype)


def _make_planes_kernel(bch: int):
    def kernel(x_ref, ah_ref, r_ref, o_ref):
        ah = ah_ref[...]
        r = r_ref[...]
        for b in range(bch):       # static unroll: clean 2-D matmul pair per plane
            xb = x_ref[b].astype(jnp.float32)                   # (H, W)
            t = jnp.dot(ah, xb, precision=_HIGHEST,
                        preferred_element_type=jnp.float32)     # (sH, W)
            o_ref[b] = jnp.dot(t, r, precision=_HIGHEST,
                               preferred_element_type=jnp.float32
                               ).astype(o_ref.dtype)            # (sH, sW) lane-dense
    return kernel


# --------------------------------------------------------------------------
# Wrappers.
# --------------------------------------------------------------------------
def _blur_upsample_packed(x, a_h, r_np, s):
    n, c, h, w = x.shape
    nc = n * c
    bch = _choose_packed_batch(nc, w, s)
    g = nc // bch
    sh, sw = s * h, s * w

    # Block-diagonalize the W-direction matrix over the channel batch.
    r_bd_np = np.zeros((bch * w, bch * sw), dtype=np.float64)
    for b in range(bch):
        r_bd_np[b * w:(b + 1) * w, b * sw:(b + 1) * sw] = r_np
    r_bd = jnp.asarray(r_bd_np, dtype=jnp.float32)          # (bch*W, bch*sW)

    # Wrapper-side lane interleave of the (small) input slab; needed only in
    # this small-W regime to get lane-dense output stores.
    xg = x.reshape(g, bch, h, w).transpose(0, 2, 1, 3).reshape(g, h, bch * w)

    # Only the nonzero (block-diagonal) work is counted.
    flops = g * (2 * sh * h * (bch * w) + bch * 2 * sh * w * sw)
    bytes_accessed = int(xg.size * xg.dtype.itemsize
                         + g * sh * bch * sw * x.dtype.itemsize
                         + a_h.size * 4 + r_bd.size * 4)

    out = pl.pallas_call(
        _packed_kernel,
        out_shape=jax.ShapeDtypeStruct((g, sh, bch * sw), x.dtype),
        grid=(g,),
        in_specs=[
            pl.BlockSpec((1, h, bch * w), lambda i: (i, 0, 0)),
            # Constant matrices: constant index_map -> single-buffered.
            pl.BlockSpec((sh, h), lambda i: (0, 0),
                         pipeline_mode=pl.Buffered(1)),
            pl.BlockSpec((bch * w, bch * sw), lambda i: (0, 0),
                         pipeline_mode=pl.Buffered(1)),
        ],
        out_specs=pl.BlockSpec((1, sh, bch * sw), lambda i: (i, 0, 0)),
        compiler_params=pltpu.CompilerParams(dimension_semantics=("parallel",)),
        cost_estimate=pl.CostEstimate(flops=int(flops), transcendentals=0,
                                      bytes_accessed=bytes_accessed),
    )(xg, a_h, r_bd)

    # (g, sH, bch*sW) -> (n, c, sH, sW)
    y = out.reshape(g, sh, bch, sw).transpose(0, 2, 1, 3)
    return y.reshape(n, c, sh, sw)


def _blur_upsample_planes(x, a_h, r, s):
    n, c, h, w = x.shape
    nc = n * c
    bch = _choose_plane_batch(nc, h, w, s)
    g = nc // bch
    sh, sw = s * h, s * w

    xp = x.reshape(nc, h, w)   # free reshape, no transpose / extra HBM pass

    flops = nc * (2 * sh * h * w + 2 * sh * w * sw)
    bytes_accessed = int(xp.size * xp.dtype.itemsize
                         + nc * sh * sw * x.dtype.itemsize
                         + a_h.size * 4 + r.size * 4)

    out = pl.pallas_call(
        _make_planes_kernel(bch),
        out_shape=jax.ShapeDtypeStruct((nc, sh, sw), x.dtype),
        grid=(g,),
        in_specs=[
            pl.BlockSpec((bch, h, w), lambda i: (i, 0, 0)),
            pl.BlockSpec((sh, h), lambda i: (0, 0),
                         pipeline_mode=pl.Buffered(1)),
            pl.BlockSpec((w, sw), lambda i: (0, 0),
                         pipeline_mode=pl.Buffered(1)),
        ],
        out_specs=pl.BlockSpec((bch, sh, sw), lambda i: (i, 0, 0)),
        compiler_params=pltpu.CompilerParams(dimension_semantics=("parallel",)),
        cost_estimate=pl.CostEstimate(flops=int(flops), transcendentals=0,
                                      bytes_accessed=bytes_accessed),
    )(xp, a_h, r)

    return out.reshape(n, c, sh, sw)


def blur_upsample(x: jax.Array, upsample_scale: int = 2) -> jax.Array:
    """x: (N, C, H, W) -> (N, C, scale*H, scale*W), matching BlurUpsample.forward."""
    n, c, h, w = x.shape
    assert h >= 2 and w >= 2, "reflect padding requires spatial dims >= 2"
    s = int(upsample_scale)

    # Fold blur into the interpolation matrices (trace-time, float64, exact).
    a_h = jnp.asarray(_bilinear_matrix(h, s) @ _blur_band_matrix(h),
                      dtype=jnp.float32)                           # (sH, H)
    r_np = (_bilinear_matrix(w, s) @ _blur_band_matrix(w)).T        # (W, sW)

    if s * w >= _LANE:
        # Output rows already lane-dense: no channel lane-packing, no wrapper
        # transposes, no block-diagonal R.
        return _blur_upsample_planes(x, a_h, jnp.asarray(r_np, jnp.float32), s)
    return _blur_upsample_packed(x, a_h, r_np, s)


# --------------------------------------------------------------------------
# Pure-JAX reference reproducing the PyTorch/kornia semantics.
# --------------------------------------------------------------------------
def _reference(x: jax.Array, upsample_scale: int = 2) -> jax.Array:
    n, c, h, w = x.shape
    xp = jnp.pad(x, ((0, 0), (0, 0), (1, 1), (1, 1)), mode="reflect")
    k1d = jnp.array([K0, K1, K0], dtype=jnp.float32)
    k2d = jnp.outer(k1d, k1d)
    b = sum(k2d[i, j] * xp[:, :, i:i + h, j:j + w]
            for i in range(3) for j in range(3))
    uh = jnp.asarray(_bilinear_matrix(h, upsample_scale), dtype=jnp.float32)
    uw = jnp.asarray(_bilinear_matrix(w, upsample_scale), dtype=jnp.float32)
    return jnp.einsum("Oh,nchw,Ww->ncOW", uh, b, uw, precision="highest")


if __name__ == "__main__":
    key = jax.random.PRNGKey(0)
    x = jax.random.normal(key, (2, 4, 16, 16), dtype=jnp.float32)

    y = jax.block_until_ready(blur_upsample(x))
    assert y.shape == (2, 4, 32, 32), y.shape

    y_ref = _reference(x)
    # Both the kernel and the reference run exact-f32 (HIGHEST) matmuls; the
    # residual difference is only the folded-vs-unfolded factorization rounding
    # (~1e-6).  Tolerance keeps headroom while still catching real bugs (>>1e-2).
    assert np.allclose(np.asarray(y), np.asarray(y_ref), rtol=1e-3, atol=1e-3)

    print("KERNEL_OK")
</pallas_src>

<mosaic_0001>
module attributes {stable_mosaic.version = 11 : i64} {
  func.func @_packed_kernel(%arg0: i32, %arg1: memref<1x16x128xf32, #tpu.memory_space<vmem>>, %arg2: memref<32x16xf32, #tpu.memory_space<vmem>>, %arg3: memref<128x256xf32, #tpu.memory_space<vmem>>, %arg4: memref<1x32x256xf32, #tpu.memory_space<vmem>>) attributes {dimension_semantics = [#tpu.dimension_semantics<parallel>], iteration_bounds = array<i64: 1>, scalar_prefetch = 0 : i64, scratch_operands = 0 : i64, tpu.core_type = #tpu.core_type<tc>, window_params = [{transform_indices = @transform_0, window_bounds = array<i64: 1, 16, 128>}, {pipeline_mode = #tpu.pipeline_mode<synchronous>, transform_indices = @transform_1, window_bounds = array<i64: 32, 16>}, {pipeline_mode = #tpu.pipeline_mode<synchronous>, transform_indices = @transform_2, window_bounds = array<i64: 128, 256>}, {transform_indices = @transform_3, window_bounds = array<i64: 1, 32, 256>}]} {
    %c0 = arith.constant 0 : index
    %c0_0 = arith.constant 0 : index
    %c0_1 = arith.constant 0 : index
    %0 = vector.load %arg1[%c0, %c0_0, %c0_1] : memref<1x16x128xf32, #tpu.memory_space<vmem>>, vector<1x16x128xf32>
    %1 = vector.shape_cast %0 : vector<1x16x128xf32> to vector<16x128xf32>
    %c0_2 = arith.constant 0 : index
    %c0_3 = arith.constant 0 : index
    %2 = vector.load %arg2[%c0_2, %c0_3] : memref<32x16xf32, #tpu.memory_space<vmem>>, vector<32x16xf32>
    %cst = arith.constant dense<0.000000e+00> : vector<32x128xf32>
    %3 = tpu.matmul %2, %1, %cst {dimension_numbers = #tpu.dot_dimension_numbers<[1], [0], [0], [1], [0, 0, 1, 1], [], []>, precision = #tpu.contract_precision<fp32>} : vector<32x16xf32>, vector<16x128xf32>, vector<32x128xf32> -> vector<32x128xf32>
    %c0_4 = arith.constant 0 : index
    %c0_5 = arith.constant 0 : index
    %4 = vector.load %arg3[%c0_4, %c0_5] : memref<128x256xf32, #tpu.memory_space<vmem>>, vector<128x256xf32>
    %cst_6 = arith.constant dense<0.000000e+00> : vector<32x256xf32>
    %5 = tpu.matmul %3, %4, %cst_6 {dimension_numbers = #tpu.dot_dimension_numbers<[1], [0], [0], [1], [0, 0, 1, 1], [], []>, precision = #tpu.contract_precision<fp32>} : vector<32x128xf32>, vector<128x256xf32>, vector<32x256xf32> -> vector<32x256xf32>
    %c0_7 = arith.constant 0 : index
    %c0_8 = arith.constant 0 : index
    %c0_9 = arith.constant 0 : index
    %6 = vector.load %arg4[%c0_7, %c0_8, %c0_9] : memref<1x32x256xf32, #tpu.memory_space<vmem>>, vector<1x32x256xf32>
    %7 = vector.shape_cast %6 : vector<1x32x256xf32> to vector<32x256xf32>
    %8 = vector.shape_cast %5 : vector<32x256xf32> to vector<1x32x256xf32>
    tpu.vector_store %arg4[%c0_7, %c0_8, %c0_9], %8 {strides = array<i32>} : memref<1x32x256xf32, #tpu.memory_space<vmem>>, vector<1x32x256xf32>,
    return
  }
  func.func @transform_0(%arg0: i32) -> (i32, i32, i32) {
    %c0_i32 = arith.constant 0 : i32
    %c0_i32_0 = arith.constant 0 : i32
    %c0_i32_1 = arith.constant 0 : i32
    return %arg0, %c0_i32, %c0_i32_0 : i32, i32, i32
  }
  func.func @transform_1(%arg0: i32) -> (i32, i32) {
    %c0_i32 = arith.constant 0 : i32
    %c0_i32_0 = arith.constant 0 : i32
    %c0_i32_1 = arith.constant 0 : i32
    return %c0_i32, %c0_i32_0 : i32, i32
  }
  func.func @transform_2(%arg0: i32) -> (i32, i32) {
    %c0_i32 = arith.constant 0 : i32
    %c0_i32_0 = arith.constant 0 : i32
    %c0_i32_1 = arith.constant 0 : i32
    return %c0_i32, %c0_i32_0 : i32, i32
  }
  func.func @transform_3(%arg0: i32) -> (i32, i32, i32) {
    %c0_i32 = arith.constant 0 : i32
    %c0_i32_0 = arith.constant 0 : i32
    %c0_i32_1 = arith.constant 0 : i32
    return %arg0, %c0_i32, %c0_i32_0 : i32, i32, i32
  }
}

</mosaic_0001>

<llo_original>
// kernel: tpu_custom_call.1
$region0: #{tpu_custom_call.1}
  #allocation0 [shape = 'u32[]', space=smem, size = 0x4, offset = 0x4, fixed_abs, tag = 'smem constant byte address 0x4 - core index']
  #allocation1 [shape = 'u32[144,128]{1,0:T(1,128)}', space=vmem, size = 0x12000, scoped, tag = 'internal scratch']
  %s0 = inlined_call_operand.vmem [shape: f32[1,16,128], index: 0, kind: input, shape index: {}]
  %s1 = inlined_call_operand.vmem [shape: f32[32,16], index: 1, kind: input, shape index: {}]
  %s2 = inlined_call_operand.hbm [shape: f32[128,256], index: 2, kind: input, shape index: {}]
  %s3 = inlined_call_operand.hbm [shape: f32[1,32,256], index: 3, kind: output, shape index: {}]
  %s4 = sld [smem:[#allocation0]]
  $region26: #{tpu_custom_call.1} parent=0
    _
  %s6 = ssub.s32 1, %s4
  %s7 = scalar_select 0, %s6, %s4
  $region1: #{tpu_custom_call.1} parent=0
    #allocation2 [shape = 'u8[131072]{0}', space=vmem, size = 0x20000, scoped, tag = 'input window, operand 2, single buffered']
    #allocation3 [shape = 's32[1]{0}', space=sflag, size = 0x4, scoped, tag = 'scoped memory for tpu_custom_call.1']
    #allocation4 [shape = 's32[1]{0}', space=sflag, size = 0x4, scoped, tag = 'scoped memory for tpu_custom_call.1']
    #allocation5 [shape = 'u8[32768]{0}', space=vmem, size = 0x8000, scoped, tag = 'output window, operand 0, single buffered']
    %8 = vsyncpa [#allocation3], 0
    %9 = vsyncpa [#allocation4], 0
    // Predicated region
    $region2: #{tpu_custom_call.1} parent=1 // pred_check
      _
    $region3: #{tpu_custom_call.1} parent=1 // pred_check_branch
      %11 = sbr.rel (0) target = $region5
    $region4: #{tpu_custom_call.1} parent=1 // pred_region
      _
    $region5: #{tpu_custom_call.1} parent=1 // pred_fallthru
      _
    // Predicated region
    $region6: #{tpu_custom_call.1} parent=1 // pred_check
      _
    $region7: #{tpu_custom_call.1} parent=1 // pred_check_branch
      %13 = sbr.rel (0) target = $region9
    $region8: #{tpu_custom_call.1} parent=1 // pred_region
      _
    $region9: #{tpu_custom_call.1} parent=1 // pred_fallthru
      _
    // Predicated region
    $region10: #{tpu_custom_call.1} parent=1 // pred_check
      _
    $region11: #{tpu_custom_call.1} parent=1 // pred_check_branch
      %15 = sbr.rel (0) target = $region13
    $region12: #{tpu_custom_call.1} parent=1 // pred_region
      %s17 = ssub.s32 4096, 4096
      %18 = vsyncadd [#allocation3], %s17
      %s19 = sshll.u32 [#allocation2], 4
      %s20 = int_to_ptr.vmem [resolvable:$true] %s19
      %25 = dma.hbm_to_vmem [thread:$0]  %s2, 4096, %s20, [#allocation3], 256, 256, 16
    $region13: #{tpu_custom_call.1} parent=1 // pred_fallthru
      _
    // Predicated region
    $region14: #{tpu_custom_call.1} parent=1 // pred_check
      _
    $region15: #{tpu_custom_call.1} parent=1 // pred_check_branch
      %27 = sbr.rel (0) target = $region17
    $region16: #{tpu_custom_call.1} parent=1 // pred_region
      %28 = dma.done [#allocation3], 4096
    $region17: #{tpu_custom_call.1} parent=1 // pred_fallthru
      _
    %v29 = vld [vmem:[%s0] sm:$0xff]
    %v30 = vld [vmem:[%s0 + $0x8] sm:$0xff]
    %v31 = vld [vmem:[%s1] sm:$0xff]
    %v32 = vld [vmem:[%s1 + $0x8] sm:$0xff]
    %v33 = vld [vmem:[%s1 + $0x10] sm:$0xff]
    %v34 = vld [vmem:[%s1 + $0x18] sm:$0xff]
    %vm35 = vcmask 130048
    %v37 = vsel %vm35, %v31, 0
    %v40 = vsel %vm35, %v32, 0
    %v43 = vsel %vm35, %v33, 0
    %v46 = vsel %vm35, %v34, 0
    %48 = vmatprep.subr.mxu0 0.0
    %v49 = vand.u32 %v29, 4294901760
    %50 = vmatpush1.msra.mxu0 %v49
    %51 = vmatprep.subr.mxu0 0.0
    %v52 = vand.u32 %v30, 4294901760
    %53 = vmatpush1.msra.mxu0 %v52
    %54 = vmatprep.subr.mxu0 0.0
    %55 = vmatpush1.msra.mxu0 0.0
    %56 = vmatprep.subr.mxu0 0.0
    %57 = vmatpush1.msra.mxu0 0.0
    %58 = vmatprep.subr.mxu0 0.0
    %59 = vmatpush1.msra.mxu0 0.0
    %60 = vmatprep.subr.mxu0 0.0
    %61 = vmatpush1.msra.mxu0 0.0
    %62 = vmatprep.subr.mxu0 0.0
    %63 = vmatpush1.msra.mxu0 0.0
    %64 = vmatprep.subr.mxu0 0.0
    %65 = vmatpush1.msra.mxu0 0.0
    %66 = vmatprep.subr.mxu0 0.0
    %67 = vmatpush1.msra.mxu0 0.0
    %68 = vmatprep.subr.mxu0 0.0
    %69 = vmatpush1.msra.mxu0 0.0
    %70 = vmatprep.subr.mxu0 0.0
    %71 = vmatpush1.msra.mxu0 0.0
    %72 = vmatprep.subr.mxu0 0.0
    %73 = vmatpush1.msra.mxu0 0.0
    %74 = vmatprep.subr.mxu0 0.0
    %75 = vmatpush1.msra.mxu0 0.0
    %76 = vmatprep.subr.mxu0 0.0
    %77 = vmatpush1.msra.mxu0 0.0
    %78 = vmatprep.subr.mxu0 0.0
    %79 = vmatpush1.msra.mxu0 0.0
    %80 = vmatprep.subr.mxu0 0.0
    %81 = vmatpush1.msra.mxu0 0.0
    %82 = vmatprep.subr.mxu0 0.0
    %83 = vmatpush1.msra.mxu0 0.0
    %84 = vmatprep.subr.mxu0 0.0
    %85 = vmatpush1.msra.mxu0 0.0
    %86 = vmatprep.subr.mxu0 0.0
    %87 = vmatpush1.msra.mxu0 0.0
    %88 = vmatprep.subr.mxu0 0.0
    %89 = vmatpush1.msra.mxu0 0.0
    %90 = vmatprep.subr.mxu0 0.0
    %91 = vmatpush1.msra.mxu0 0.0
    %92 = vmatprep.subr.mxu0 0.0
    %93 = vmatpush1.msra.mxu0 0.0
    %94 = vmatprep.subr.mxu0 0.0
    %95 = vmatpush1.msra.mxu0 0.0
    %96 = vmatprep.subr.mxu0 0.0
    %97 = vmatpush1.msra.mxu0 0.0
    %98 = vmatprep.subr.mxu0 0.0
    %99 = vmatpush1.msra.mxu0 0.0
    %100 = vmatprep.subr.mxu0 0.0
    %101 = vmatpush1.msra.mxu0 0.0
    %102 = vmatprep.subr.mxu0 0.0
    %103 = vmatpush1.msra.mxu0 0.0
    %104 = vmatprep.subr.mxu0 0.0
    %105 = vmatpush1.msra.mxu0 0.0
    %106 = vmatprep.subr.mxu0 0.0
    %107 = vmatpush1.msra.mxu0 0.0
    %108 = vmatprep.subr.mxu0 0.0
    %109 = vmatpush1.msra.mxu0 0.0
    %110 = vmatprep.subr.mxu0 0.0
    %111 = vmatpush1.msra.mxu0 0.0
    %112 = vmatprep.subr.mxu0 0.0
    %113 = vmatpush1.msra.mxu0 0.0
    %114 = vmatprep.mubr.f32.mxu0 0.0
    %v115 = vand.u32 %v37, 4294901760
    %v116 = vsub.f32 %v37, %v115
    %v117 = vand.u32 %v116, 4294901760
    %v118 = vsub.f32 %v116, %v117
    %v119 = vand.u32 %v118, 4294901760
    %120 = vmatmul.mubr.f32.gmra.mrb[0].mxu0 %v119
    %v121 = vpop.f32.mrb[0].mxu0
    %v122 = vadd.f32 0.0, %v121
    %v123 = vpop.f32.mrb[0].mxu0
    %124 = vmatprep.mubr.f32.mxu0 0.0
    %v125 = vand.u32 %v40, 4294901760
    %v126 = vsub.f32 %v40, %v125
    %v127 = vand.u32 %v126, 4294901760
    %v128 = vsub.f32 %v126, %v127
    %v129 = vand.u32 %v128, 4294901760
    %130 = vmatmul.mubr.f32.gmra.mrb[0].mxu0 %v129
    %v131 = vpop.f32.mrb[0].mxu0
    %v132 = vadd.f32 0.0, %v131
    %v133 = vpop.f32.mrb[0].mxu0
    %134 = vmatprep.mubr.f32.mxu0 0.0
    %v135 = vand.u32 %v43, 4294901760
    %v136 = vsub.f32 %v43, %v135
    %v137 = vand.u32 %v136, 4294901760
    %v138 = vsub.f32 %v136, %v137
    %v139 = vand.u32 %v138, 4294901760
    %140 = vmatmul.mubr.f32.gmra.mrb[0].mxu0 %v139
    %v141 = vpop.f32.mrb[0].mxu0
    %v142 = vadd.f32 0.0, %v141
    %v143 = vpop.f32.mrb[0].mxu0
    %144 = vmatprep.mubr.f32.mxu0 0.0
    %v145 = vand.u32 %v46, 4294901760
    %v146 = vsub.f32 %v46, %v145
    %v147 = vand.u32 %v146, 4294901760
    %v148 = vsub.f32 %v146, %v147
    %v149 = vand.u32 %v148, 4294901760
    %150 = vmatmul.mubr.f32.gmra.mrb[0].mxu0 %v149
    %v151 = vpop.f32.mrb[0].mxu0
    %v152 = vadd.f32 0.0, %v151
    %v153 = vpop.f32.mrb[0].mxu0
    %154 = vdwg.mxu0
    %155 = vmatprep.subr.mxu0 0.0
    %v156 = vand.u32 %v29, 4294901760
    %v157 = vsub.f32 %v29, %v156
    %v158 = vand.u32 %v157, 4294901760
    %v159 = vsub.f32 %v157, %v158
    %v160 = vand.u32 %v159, 4294901760
    %161 = vmatpush1.msra.mxu0 %v160
    %162 = vmatprep.subr.mxu0 0.0
    %v163 = vand.u32 %v30, 4294901760
    %v164 = vsub.f32 %v30, %v163
    %v165 = vand.u32 %v164, 4294901760
    %v166 = vsub.f32 %v164, %v165
    %v167 = vand.u32 %v166, 4294901760
    %168 = vmatpush1.msra.mxu0 %v167
    %169 = vmatprep.subr.mxu0 0.0
    %170 = vmatpush1.msra.mxu0 0.0
    %171 = vmatprep.subr.mxu0 0.0
    %172 = vmatpush1.msra.mxu0 0.0
    %173 = vmatprep.subr.mxu0 0.0
    %174 = vmatpush1.msra.mxu0 0.0
    %175 = vmatprep.subr.mxu0 0.0
    %176 = vmatpush1.msra.mxu0 0.0
    %177 = vmatprep.subr.mxu0 0.0
    %178 = vmatpush1.msra.mxu0 0.0
    %179 = vmatprep.subr.mxu0 0.0
    %180 = vmatpush1.msra.mxu0 0.0
    %181 = vmatprep.subr.mxu0 0.0
    %182 = vmatpush1.msra.mxu0 0.0
    %183 = vmatprep.subr.mxu0 0.0
    %184 = vmatpush1.msra.mxu0 0.0
    %185 = vmatprep.subr.mxu0 0.0
    %186 = vmatpush1.msra.mxu0 0.0
    %187 = vmatprep.subr.mxu0 0.0
    %188 = vmatpush1.msra.mxu0 0.0
    %189 = vmatprep.subr.mxu0 0.0
    %190 = vmatpush1.msra.mxu0 0.0
    %191 = vmatprep.subr.mxu0 0.0
    %192 = vmatpush1.msra.mxu0 0.0
    %193 = vmatprep.subr.mxu0 0.0
    %194 = vmatpush1.msra.mxu0 0.0
    %195 = vmatprep.subr.mxu0 0.0
    %196 = vmatpush1.msra.mxu0 0.0
    %197 = vmatprep.subr.mxu0 0.0
    %198 = vmatpush1.msra.mxu0 0.0
    %199 = vmatprep.subr.mxu0 0.0
    %200 = vmatpush1.msra.mxu0 0.0
    %201 = vmatprep.subr.mxu0 0.0
    %202 = vmatpush1.msra.mxu0 0.0
    %203 = vmatprep.subr.mxu0 0.0
    %204 = vmatpush1.msra.mxu0 0.0
    %205 = vmatprep.subr.mxu0 0.0
    %206 = vmatpush1.msra.mxu0 0.0
    %207 = vmatprep.subr.mxu0 0.0
    %208 = vmatpush1.msra.mxu0 0.0
    %209 = vmatprep.subr.mxu0 0.0
    %210 = vmatpush1.msra.mxu0 0.0
    %211 = vmatprep.subr.mxu0 0.0
    %212 = vmatpush1.msra.mxu0 0.0
    %213 = vmatprep.subr.mxu0 0.0
    %214 = vmatpush1.msra.mxu0 0.0
    %215 = vmatprep.subr.mxu0 0.0
    %216 = vmatpush1.msra.mxu0 0.0
    %217 = vmatprep.subr.mxu0 0.0
    %218 = vmatpush1.msra.mxu0 0.0
    %219 = vmatprep.subr.mxu0 0.0
    %220 = vmatpush1.msra.mxu0 0.0
    %221 = vmatprep.subr.mxu0 0.0
    %222 = vmatpush1.msra.mxu0 0.0
    %223 = vmatprep.subr.mxu0 0.0
    %224 = vmatpush1.msra.mxu0 0.0
    %225 = vmatprep.subr.mxu0 0.0
    %226 = vmatpush1.msra.mxu0 0.0
    %227 = vmatprep.subr.mxu0 0.0
    %228 = vmatpush1.msra.mxu0 0.0
    %229 = vmatprep.mubr.f32.mxu0 0.0
    %v230 = vand.u32 %v37, 4294901760
    %231 = vmatmul.mubr.f32.gmra.mrb[0].mxu0 %v230
    %v232 = vpop.f32.mrb[0].mxu0
    %v233 = vadd.f32 %v122, %v232
    %v234 = vpop.f32.mrb[0].mxu0
    %235 = vmatprep.mubr.f32.mxu0 0.0
    %v236 = vand.u32 %v40, 4294901760
    %237 = vmatmul.mubr.f32.gmra.mrb[0].mxu0 %v236
    %v238 = vpop.f32.mrb[0].mxu0
    %v239 = vadd.f32 %v132, %v238
    %v240 = vpop.f32.mrb[0].mxu0
    %241 = vmatprep.mubr.f32.mxu0 0.0
    %v242 = vand.u32 %v43, 4294901760
    %243 = vmatmul.mubr.f32.gmra.mrb[0].mxu0 %v242
    %v244 = vpop.f32.mrb[0].mxu0
    %v245 = vadd.f32 %v142, %v244
    %v246 = vpop.f32.mrb[0].mxu0
    %247 = vmatprep.mubr.f32.mxu0 0.0
    %v248 = vand.u32 %v46, 4294901760
    %249 = vmatmul.mubr.f32.gmra.mrb[0].mxu0 %v248
    %v250 = vpop.f32.mrb[0].mxu0
    %v251 = vadd.f32 %v152, %v250
    %v252 = vpop.f32.mrb[0].mxu0
    %253 = vdwg.mxu0
    %254 = vmatprep.subr.mxu0 0.0
    %v255 = vand.u32 %v29, 4294901760
    %v256 = vsub.f32 %v29, %v255
    %257 = vmatpush1.msra.mxu0 %v256
    %258 = vmatprep.subr.mxu0 0.0
    %v259 = vand.u32 %v30, 4294901760
    %v260 = vsub.f32 %v30, %v259
    %261 = vmatpush1.msra.mxu0 %v260
    %262 = vmatprep.subr.mxu0 0.0
    %263 = vmatpush1.msra.mxu0 0.0
    %264 = vmatprep.subr.mxu0 0.0
    %265 = vmatpush1.msra.mxu0 0.0
    %266 = vmatprep.subr.mxu0 0.0
    %267 = vmatpush1.msra.mxu0 0.0
    %268 = vmatprep.subr.mxu0 0.0
    %269 = vmatpush1.msra.mxu0 0.0
    %270 = vmatprep.subr.mxu0 0.0
    %271 = vmatpush1.msra.mxu0 0.0
    %272 = vmatprep.subr.mxu0 0.0
    %273 = vmatpush1.msra.mxu0 0.0
    %274 = vmatprep.subr.mxu0 0.0
    %275 = vmatpush1.msra.mxu0 0.0
    %276 = vmatprep.subr.mxu0 0.0
    %277 = vmatpush1.msra.mxu0 0.0
    %278 = vmatprep.subr.mxu0 0.0
    %279 = vmatpush1.msra.mxu0 0.0
    %280 = vmatprep.subr.mxu0 0.0
    %281 = vmatpush1.msra.mxu0 0.0
    %282 = vmatprep.subr.mxu0 0.0
    %283 = vmatpush1.msra.mxu0 0.0
    %284 = vmatprep.subr.mxu0 0.0
    %285 = vmatpush1.msra.mxu0 0.0
    %286 = vmatprep.subr.mxu0 0.0
    %287 = vmatpush1.msra.mxu0 0.0
    %288 = vmatprep.subr.mxu0 0.0
    %289 = vmatpush1.msra.mxu0 0.0
    %290 = vmatprep.subr.mxu0 0.0
    %291 = vmatpush1.msra.mxu0 0.0
    %292 = vmatprep.subr.mxu0 0.0
    %293 = vmatpush1.msra.mxu0 0.0
    %294 = vmatprep.subr.mxu0 0.0
    %295 = vmatpush1.msra.mxu0 0.0
    %296 = vmatprep.subr.mxu0 0.0
    %297 = vmatpush1.msra.mxu0 0.0
    %298 = vmatprep.subr.mxu0 0.0
    %299 = vmatpush1.msra.mxu0 0.0
    %300 = vmatprep.subr.mxu0 0.0
    %301 = vmatpush1.msra.mxu0 0.0
    %302 = vmatprep.subr.mxu0 0.0
    %303 = vmatpush1.msra.mxu0 0.0
    %304 = vmatprep.subr.mxu0 0.0
    %305 = vmatpush1.msra.mxu0 0.0
    %306 = vmatprep.subr.mxu0 0.0
    %307 = vmatpush1.msra.mxu0 0.0
    %308 = vmatprep.subr.mxu0 0.0
    %309 = vmatpush1.msra.mxu0 0.0
    %310 = vmatprep.subr.mxu0 0.0
    %311 = vmatpush1.msra.mxu0 0.0
    %312 = vmatprep.subr.mxu0 0.0
    %313 = vmatpush1.msra.mxu0 0.0
    %314 = vmatprep.subr.mxu0 0.0
    %315 = vmatpush1.msra.mxu0 0.0
    %316 = vmatprep.subr.mxu0 0.0
    %317 = vmatpush1.msra.mxu0 0.0
    %318 = vmatprep.subr.mxu0 0.0
    %319 = vmatpush1.msra.mxu0 0.0
    %320 = vmatprep.subr.mxu0 0.0
    %321 = vmatpush1.msra.mxu0 0.0
    %322 = vmatprep.mubr.f32.mxu0 0.0
    %v323 = vand.u32 %v37, 4294901760
    %v324 = vsub.f32 %v37, %v323
    %325 = vmatmul.mubr.f32.gmra.mrb[0].mxu0 %v324
    %v326 = vpop.f32.mrb[0].mxu0
    %v327 = vadd.f32 %v233, %v326
    %v328 = vpop.f32.mrb[0].mxu0
    %329 = vmatprep.mubr.f32.mxu0 0.0
    %v330 = vand.u32 %v40, 4294901760
    %v331 = vsub.f32 %v40, %v330
    %332 = vmatmul.mubr.f32.gmra.mrb[0].mxu0 %v331
    %v333 = vpop.f32.mrb[0].mxu0
    %v334 = vadd.f32 %v239, %v333
    %v335 = vpop.f32.mrb[0].mxu0
    %336 = vmatprep.mubr.f32.mxu0 0.0
    %v337 = vand.u32 %v43, 4294901760
    %v338 = vsub.f32 %v43, %v337
    %339 = vmatmul.mubr.f32.gmra.mrb[0].mxu0 %v338
    %v340 = vpop.f32.mrb[0].mxu0
    %v341 = vadd.f32 %v245, %v340
    %v342 = vpop.f32.mrb[0].mxu0
    %343 = vmatprep.mubr.f32.mxu0 0.0
    %v344 = vand.u32 %v46, 4294901760
    %v345 = vsub.f32 %v46, %v344
    %346 = vmatmul.mubr.f32.gmra.mrb[0].mxu0 %v345
    %v347 = vpop.f32.mrb[0].mxu0
    %v348 = vadd.f32 %v251, %v347
    %v349 = vpop.f32.mrb[0].mxu0
    %350 = vdwg.mxu0
    %351 = vmatprep.subr.mxu0 0.0
    %v352 = vand.u32 %v29, 4294901760
    %353 = vmatpush1.msra.mxu0 %v352
    %354 = vmatprep.subr.mxu0 0.0
    %v355 = vand.u32 %v30, 4294901760
    %356 = vmatpush1.msra.mxu0 %v355
    %357 = vmatprep.subr.mxu0 0.0
    %358 = vmatpush1.msra.mxu0 0.0
    %359 = vmatprep.subr.mxu0 0.0
    %360 = vmatpush1.msra.mxu0 0.0
    %361 = vmatprep.subr.mxu0 0.0
    %362 = vmatpush1.msra.mxu0 0.0
    %363 = vmatprep.subr.mxu0 0.0
    %364 = vmatpush1.msra.mxu0 0.0
    %365 = vmatprep.subr.mxu0 0.0
    %366 = vmatpush1.msra.mxu0 0.0
    %367 = vmatprep.subr.mxu0 0.0
    %368 = vmatpush1.msra.mxu0 0.0
    %369 = vmatprep.subr.mxu0 0.0
    %370 = vmatpush1.msra.mxu0 0.0
    %371 = vmatprep.subr.mxu0 0.0
    %372 = vmatpush1.msra.mxu0 0.0
    %373 = vmatprep.subr.mxu0 0.0
    %374 = vmatpush1.msra.mxu0 0.0
    %375 = vmatprep.subr.mxu0 0.0
    %376 = vmatpush1.msra.mxu0 0.0
    %377 = vmatprep.subr.mxu0 0.0
    %378 = vmatpush1.msra.mxu0 0.0
    %379 = vmatprep.subr.mxu0 0.0
    %380 = vmatpush1.msra.mxu0 0.0
    %381 = vmatprep.subr.mxu0 0.0
    %382 = vmatpush1.msra.mxu0 0.0
    %383 = vmatprep.subr.mxu0 0.0
    %384 = vmatpush1.msra.mxu0 0.0
    %385 = vmatprep.subr.mxu0 0.0
    %386 = vmatpush1.msra.mxu0 0.0
    %387 = vmatprep.subr.mxu0 0.0
    %388 = vmatpush1.msra.mxu0 0.0
    %389 = vmatprep.subr.mxu0 0.0
    %390 = vmatpush1.msra.mxu0 0.0
    %391 = vmatprep.subr.mxu0 0.0
    %392 = vmatpush1.msra.mxu0 0.0
    %393 = vmatprep.subr.mxu0 0.0
    %394 = vmatpush1.msra.mxu0 0.0
    %395 = vmatprep.subr.mxu0 0.0
    %396 = vmatpush1.msra.mxu0 0.0
    %397 = vmatprep.subr.mxu0 0.0
    %398 = vmatpush1.msra.mxu0 0.0
    %399 = vmatprep.subr.mxu0 0.0
    %400 = vmatpush1.msra.mxu0 0.0
    %401 = vmatprep.subr.mxu0 0.0
    %402 = vmatpush1.msra.mxu0 0.0
    %403 = vmatprep.subr.mxu0 0.0
    %404 = vmatpush1.msra.mxu0 0.0
    %405 = vmatprep.subr.mxu0 0.0
    %406 = vmatpush1.msra.mxu0 0.0
    %407 = vmatprep.subr.mxu0 0.0
    %408 = vmatpush1.msra.mxu0 0.0
    %409 = vmatprep.subr.mxu0 0.0
    %410 = vmatpush1.msra.mxu0 0.0
    %411 = vmatprep.subr.mxu0 0.0
    %412 = vmatpush1.msra.mxu0 0.0
    %413 = vmatprep.subr.mxu0 0.0
    %414 = vmatpush1.msra.mxu0 0.0
    %415 = vmatprep.subr.mxu0 0.0
    %416 = vmatpush1.msra.mxu0 0.0
    %417 = vmatprep.mubr.f32.mxu0 0.0
    %v418 = vand.u32 %v37, 4294901760
    %v419 = vsub.f32 %v37, %v418
    %v420 = vand.u32 %v419, 4294901760
    %421 = vmatmul.mubr.f32.gmra.mrb[0].mxu0 %v420
    %v422 = vpop.f32.mrb[0].mxu0
    %v423 = vadd.f32 %v327, %v422
    %v424 = vpop.f32.mrb[0].mxu0
    %425 = vmatprep.mubr.f32.mxu0 0.0
    %v426 = vand.u32 %v40, 4294901760
    %v427 = vsub.f32 %v40, %v426
    %v428 = vand.u32 %v427, 4294901760
    %429 = vmatmul.mubr.f32.gmra.mrb[0].mxu0 %v428
    %v430 = vpop.f32.mrb[0].mxu0
    %v431 = vadd.f32 %v334, %v430
    %v432 = vpop.f32.mrb[0].mxu0
    %433 = vmatprep.mubr.f32.mxu0 0.0
    %v434 = vand.u32 %v43, 4294901760
    %v435 = vsub.f32 %v43, %v434
    %v436 = vand.u32 %v435, 4294901760
    %437 = vmatmul.mubr.f32.gmra.mrb[0].mxu0 %v436
    %v438 = vpop.f32.mrb[0].mxu0
    %v439 = vadd.f32 %v341, %v438
    %v440 = vpop.f32.mrb[0].mxu0
    %441 = vmatprep.mubr.f32.mxu0 0.0
    %v442 = vand.u32 %v46, 4294901760
    %v443 = vsub.f32 %v46, %v442
    %v444 = vand.u32 %v443, 4294901760
    %445 = vmatmul.mubr.f32.gmra.mrb[0].mxu0 %v444
    %v446 = vpop.f32.mrb[0].mxu0
    %v447 = vadd.f32 %v348, %v446
    %v448 = vpop.f32.mrb[0].mxu0
    %449 = vdwg.mxu0
    %450 = vmatprep.subr.mxu0 0.0
    %v451 = vand.u32 %v29, 4294901760
    %v452 = vsub.f32 %v29, %v451
    %v453 = vand.u32 %v452, 4294901760
    %454 = vmatpush1.msra.mxu0 %v453
    %455 = vmatprep.subr.mxu0 0.0
    %v456 = vand.u32 %v30, 4294901760
    %v457 = vsub.f32 %v30, %v456
    %v458 = vand.u32 %v457, 4294901760
    %459 = vmatpush1.msra.mxu0 %v458
    %460 = vmatprep.subr.mxu0 0.0
    %461 = vmatpush1.msra.mxu0 0.0
    %462 = vmatprep.subr.mxu0 0.0
    %463 = vmatpush1.msra.mxu0 0.0
    %464 = vmatprep.subr.mxu0 0.0
    %465 = vmatpush1.msra.mxu0 0.0
    %466 = vmatprep.subr.mxu0 0.0
    %467 = vmatpush1.msra.mxu0 0.0
    %468 = vmatprep.subr.mxu0 0.0
    %469 = vmatpush1.msra.mxu0 0.0
    %470 = vmatprep.subr.mxu0 0.0
    %471 = vmatpush1.msra.mxu0 0.0
    %472 = vmatprep.subr.mxu0 0.0
    %473 = vmatpush1.msra.mxu0 0.0
    %474 = vmatprep.subr.mxu0 0.0
    %475 = vmatpush1.msra.mxu0 0.0
    %476 = vmatprep.subr.mxu0 0.0
    %477 = vmatpush1.msra.mxu0 0.0
    %478 = vmatprep.subr.mxu0 0.0
    %479 = vmatpush1.msra.mxu0 0.0
    %480 = vmatprep.subr.mxu0 0.0
    %481 = vmatpush1.msra.mxu0 0.0
    %482 = vmatprep.subr.mxu0 0.0
    %483 = vmatpush1.msra.mxu0 0.0
    %484 = vmatprep.subr.mxu0 0.0
    %485 = vmatpush1.msra.mxu0 0.0
    %486 = vmatprep.subr.mxu0 0.0
    %487 = vmatpush1.msra.mxu0 0.0
    %488 = vmatprep.subr.mxu0 0.0
    %489 = vmatpush1.msra.mxu0 0.0
    %490 = vmatprep.subr.mxu0 0.0
    %491 = vmatpush1.msra.mxu0 0.0
    %492 = vmatprep.subr.mxu0 0.0
    %493 = vmatpush1.msra.mxu0 0.0
    %494 = vmatprep.subr.mxu0 0.0
    %495 = vmatpush1.msra.mxu0 0.0
    %496 = vmatprep.subr.mxu0 0.0
    %497 = vmatpush1.msra.mxu0 0.0
    %498 = vmatprep.subr.mxu0 0.0
    %499 = vmatpush1.msra.mxu0 0.0
    %500 = vmatprep.subr.mxu0 0.0
    %501 = vmatpush1.msra.mxu0 0.0
    %502 = vmatprep.subr.mxu0 0.0
    %503 = vmatpush1.msra.mxu0 0.0
    %504 = vmatprep.subr.mxu0 0.0
    %505 = vmatpush1.msra.mxu0 0.0
    %506 = vmatprep.subr.mxu0 0.0
    %507 = vmatpush1.msra.mxu0 0.0
    %508 = vmatprep.subr.mxu0 0.0
    %509 = vmatpush1.msra.mxu0 0.0
    %510 = vmatprep.subr.mxu0 0.0
    %511 = vmatpush1.msra.mxu0 0.0
    %512 = vmatprep.subr.mxu0 0.0
    %513 = vmatpush1.msra.mxu0 0.0
    %514 = vmatprep.subr.mxu0 0.0
    %515 = vmatpush1.msra.mxu0 0.0
    %516 = vmatprep.subr.mxu0 0.0
    %517 = vmatpush1.msra.mxu0 0.0
    %518 = vmatprep.subr.mxu0 0.0
    %519 = vmatpush1.msra.mxu0 0.0
    %520 = vmatprep.mubr.f32.mxu0 0.0
    %v521 = vand.u32 %v37, 4294901760
    %522 = vmatmul.mubr.f32.gmra.mrb[0].mxu0 %v521
    %v523 = vpop.f32.mrb[0].mxu0
    %v524 = vadd.f32 %v423, %v523
    %v525 = vpop.f32.mrb[0].mxu0
    %526 = vmatprep.mubr.f32.mxu0 0.0
    %v527 = vand.u32 %v40, 4294901760
    %528 = vmatmul.mubr.f32.gmra.mrb[0].mxu0 %v527
    %v529 = vpop.f32.mrb[0].mxu0
    %v530 = vadd.f32 %v431, %v529
    %v531 = vpop.f32.mrb[0].mxu0
    %532 = vmatprep.mubr.f32.mxu0 0.0
    %v533 = vand.u32 %v43, 4294901760
    %534 = vmatmul.mubr.f32.gmra.mrb[0].mxu0 %v533
    %v535 = vpop.f32.mrb[0].mxu0
    %v536 = vadd.f32 %v439, %v535
    %v537 = vpop.f32.mrb[0].mxu0
    %538 = vmatprep.mubr.f32.mxu0 0.0
    %v539 = vand.u32 %v46, 4294901760
    %540 = vmatmul.mubr.f32.gmra.mrb[0].mxu0 %v539
    %v541 = vpop.f32.mrb[0].mxu0
    %v542 = vadd.f32 %v447, %v541
    %v543 = vpop.f32.mrb[0].mxu0
    %544 = vdwg.mxu0
    %545 = vmatprep.subr.mxu0 0.0
    %v546 = vand.u32 %v29, 4294901760
    %547 = vmatpush1.msra.mxu0 %v546
    %548 = vmatprep.subr.mxu0 0.0
    %v549 = vand.u32 %v30, 4294901760
    %550 = vmatpush1.msra.mxu0 %v549
    %551 = vmatprep.subr.mxu0 0.0
    %552 = vmatpush1.msra.mxu0 0.0
    %553 = vmatprep.subr.mxu0 0.0
    %554 = vmatpush1.msra.mxu0 0.0
    %555 = vmatprep.subr.mxu0 0.0
    %556 = vmatpush1.msra.mxu0 0.0
    %557 = vmatprep.subr.mxu0 0.0
    %558 = vmatpush1.msra.mxu0 0.0
    %559 = vmatprep.subr.mxu0 0.0
    %560 = vmatpush1.msra.mxu0 0.0
    %561 = vmatprep.subr.mxu0 0.0
    %562 = vmatpush1.msra.mxu0 0.0
    %563 = vmatprep.subr.mxu0 0.0
    %564 = vmatpush1.msra.mxu0 0.0
    %565 = vmatprep.subr.mxu0 0.0
    %566 = vmatpush1.msra.mxu0 0.0
    %567 = vmatprep.subr.mxu0 0.0
    %568 = vmatpush1.msra.mxu0 0.0
    %569 = vmatprep.subr.mxu0 0.0
    %570 = vmatpush1.msra.mxu0 0.0
    %571 = vmatprep.subr.mxu0 0.0
    %572 = vmatpush1.msra.mxu0 0.0
    %573 = vmatprep.subr.mxu0 0.0
    %574 = vmatpush1.msra.mxu0 0.0
    %575 = vmatprep.subr.mxu0 0.0
    %576 = vmatpush1.msra.mxu0 0.0
    %577 = vmatprep.subr.mxu0 0.0
    %578 = vmatpush1.msra.mxu0 0.0
    %579 = vmatprep.subr.mxu0 0.0
    %580 = vmatpush1.msra.mxu0 0.0
    %581 = vmatprep.subr.mxu0 0.0
    %582 = vmatpush1.msra.mxu0 0.0
    %583 = vmatprep.subr.mxu0 0.0
    %584 = vmatpush1.msra.mxu0 0.0
    %585 = vmatprep.subr.mxu0 0.0
    %586 = vmatpush1.msra.mxu0 0.0
    %587 = vmatprep.subr.mxu0 0.0
    %588 = vmatpush1.msra.mxu0 0.0
    %589 = vmatprep.subr.mxu0 0.0
    %590 = vmatpush1.msra.mxu0 0.0
    %591 = vmatprep.subr.mxu0 0.0
    %592 = vmatpush1.msra.mxu0 0.0
    %593 = vmatprep.subr.mxu0 0.0
    %594 = vmatpush1.msra.mxu0 0.0
    %595 = vmatprep.subr.mxu0 0.0
    %596 = vmatpush1.msra.mxu0 0.0
    %597 = vmatprep.subr.mxu0 0.0
    %598 = vmatpush1.msra.mxu0 0.0
    %599 = vmatprep.subr.mxu0 0.0
    %600 = vmatpush1.msra.mxu0 0.0
    %601 = vmatprep.subr.mxu0 0.0
    %602 = vmatpush1.msra.mxu0 0.0
    %603 = vmatprep.subr.mxu0 0.0
    %604 = vmatpush1.msra.mxu0 0.0
    %605 = vmatprep.subr.mxu0 0.0
    %606 = vmatpush1.msra.mxu0 0.0
    %607 = vmatprep.subr.mxu0 0.0
    %608 = vmatpush1.msra.mxu0 0.0
    %609 = vmatprep.subr.mxu0 0.0
    %610 = vmatpush1.msra.mxu0 0.0
    %611 = vmatprep.mubr.f32.mxu0 0.0
    %v612 = vand.u32 %v37, 4294901760
    %613 = vmatmul.mubr.f32.gmra.mrb[0].mxu0 %v612
    %v614 = vpop.f32.mrb[0].mxu0
    %v615 = vadd.f32 %v524, %v614
    %v616 = vpop.f32.mrb[0].mxu0
    %617 = vmatprep.mubr.f32.mxu0 0.0
    %v618 = vand.u32 %v40, 4294901760
    %619 = vmatmul.mubr.f32.gmra.mrb[0].mxu0 %v618
    %v620 = vpop.f32.mrb[0].mxu0
    %v621 = vadd.f32 %v530, %v620
    %v622 = vpop.f32.mrb[0].mxu0
    %623 = vmatprep.mubr.f32.mxu0 0.0
    %v624 = vand.u32 %v43, 4294901760
    %625 = vmatmul.mubr.f32.gmra.mrb[0].mxu0 %v624
    %v626 = vpop.f32.mrb[0].mxu0
    %v627 = vadd.f32 %v536, %v626
    %v628 = vpop.f32.mrb[0].mxu0
    %629 = vmatprep.mubr.f32.mxu0 0.0
    %v630 = vand.u32 %v46, 4294901760
    %631 = vmatmul.mubr.f32.gmra.mrb[0].mxu0 %v630
    %v632 = vpop.f32.mrb[0].mxu0
    %v633 = vadd.f32 %v542, %v632
    %v634 = vpop.f32.mrb[0].mxu0
    %635 = vdwg.mxu0
    %v636 = vld [vmem:[#allocation2] sm:$0xff]
    %v637 = vld [vmem:[#allocation2 + $0x8] sm:$0xff]
    %v638 = vld [vmem:[#allocation2 + $0x10] sm:$0xff]
    %v639 = vld [vmem:[#allocation2 + $0x18] sm:$0xff]
    %v640 = vld [vmem:[#allocation2 + $0x20] sm:$0xff]
    %v641 = vld [vmem:[#allocation2 + $0x28] sm:$0xff]
    %v642 = vld [vmem:[#allocation2 + $0x30] sm:$0xff]
    %v643 = vld [vmem:[#allocation2 + $0x38] sm:$0xff]
    %v644 = vld [vmem:[#allocation2 + $0x40] sm:$0xff]
    %v645 = vld [vmem:[#allocation2 + $0x48] sm:$0xff]
    %v646 = vld [vmem:[#allocation2 + $0x50] sm:$0xff]
    %v647 = vld [vmem:[#allocation2 + $0x58] sm:$0xff]
    %v648 = vld [vmem:[#allocation2 + $0x60] sm:$0xff]
    %v649 = vld [vmem:[#allocation2 + $0x68] sm:$0xff]
    %v650 = vld [vmem:[#allocation2 + $0x70] sm:$0xff]
    %v651 = vld [vmem:[#allocation2 + $0x78] sm:$0xff]
    %v652 = vld [vmem:[#allocation2 + $0x80] sm:$0xff]
    %v653 = vld [vmem:[#allocation2 + $0x88] sm:$0xff]
    %v654 = vld [vmem:[#allocation2 + $0x90] sm:$0xff]
    %v655 = vld [vmem:[#allocation2 + $0x98] sm:$0xff]
    %v656 = vld [vmem:[#allocation2 + $0xa0] sm:$0xff]
    %v657 = vld [vmem:[#allocation2 + $0xa8] sm:$0xff]
    %v658 = vld [vmem:[#allocation2 + $0xb0] sm:$0xff]
    %v659 = vld [vmem:[#allocation2 + $0xb8] sm:$0xff]
    %v660 = vld [vmem:[#allocation2 + $0xc0] sm:$0xff]
    %v661 = vld [vmem:[#allocation2 + $0xc8] sm:$0xff]
    %v662 = vld [vmem:[#allocation2 + $0xd0] sm:$0xff]
    %v663 = vld [vmem:[#allocation2 + $0xd8] sm:$0xff]
    %v664 = vld [vmem:[#allocation2 + $0xe0] sm:$0xff]
    %v665 = vld [vmem:[#allocation2 + $0xe8] sm:$0xff]
    %v666 = vld [vmem:[#allocation2 + $0xf0] sm:$0xff]
    %v667 = vld [vmem:[#allocation2 + $0xf8] sm:$0xff]
    %v668 = vand.u32 %v637, 4294901760
    %669 = vmatprep.subr.mxu0 %v668
    %v670 = vand.u32 %v636, 4294901760
    %671 = vmatpush1.msra.mxu0 %v670
    %v672 = vand.u32 %v639, 4294901760
    %673 = vmatprep.subr.mxu0 %v672
    %v674 = vand.u32 %v638, 4294901760
    %675 = vmatpush1.msra.mxu0 %v674
    %v676 = vand.u32 %v641, 4294901760
    %677 = vmatprep.subr.mxu0 %v676
    %v678 = vand.u32 %v640, 4294901760
    %679 = vmatpush1.msra.mxu0 %v678
    %v680 = vand.u32 %v643, 4294901760
    %681 = vmatprep.subr.mxu0 %v680
    %v682 = vand.u32 %v642, 4294901760
    %683 = vmatpush1.msra.mxu0 %v682
    %v684 = vand.u32 %v645, 4294901760
    %685 = vmatprep.subr.mxu0 %v684
    %v686 = vand.u32 %v644, 4294901760
    %687 = vmatpush1.msra.mxu0 %v686
    %v688 = vand.u32 %v647, 4294901760
    %689 = vmatprep.subr.mxu0 %v688
    %v690 = vand.u32 %v646, 4294901760
    %691 = vmatpush1.msra.mxu0 %v690
    %v692 = vand.u32 %v649, 4294901760
    %693 = vmatprep.subr.mxu0 %v692
    %v694 = vand.u32 %v648, 4294901760
    %695 = vmatpush1.msra.mxu0 %v694
    %v696 = vand.u32 %v651, 4294901760
    %697 = vmatprep.subr.mxu0 %v696
    %v698 = vand.u32 %v650, 4294901760
    %699 = vmatpush1.msra.mxu0 %v698
    %v700 = vand.u32 %v653, 4294901760
    %701 = vmatprep.subr.mxu0 %v700
    %v702 = vand.u32 %v652, 4294901760
    %703 = vmatpush1.msra.mxu0 %v702
    %v704 = vand.u32 %v655, 4294901760
    %705 = vmatprep.subr.mxu0 %v704
    %v706 = vand.u32 %v654, 4294901760
    %707 = vmatpush1.msra.mxu0 %v706
    %v708 = vand.u32 %v657, 4294901760
    %709 = vmatprep.subr.mxu0 %v708
    %v710 = vand.u32 %v656, 4294901760
    %711 = vmatpush1.msra.mxu0 %v710
    %v712 = vand.u32 %v659, 4294901760
    %713 = vmatprep.subr.mxu0 %v712
    %v714 = vand.u32 %v658, 4294901760
    %715 = vmatpush1.msra.mxu0 %v714
    %v716 = vand.u32 %v661, 4294901760
    %717 = vmatprep.subr.mxu0 %v716
    %v718 = vand.u32 %v660, 4294901760
    %719 = vmatpush1.msra.mxu0 %v718
    %v720 = vand.u32 %v663, 4294901760
    %721 = vmatprep.subr.mxu0 %v720
    %v722 = vand.u32 %v662, 4294901760
    %723 = vmatpush1.msra.mxu0 %v722
    %v724 = vand.u32 %v665, 4294901760
    %725 = vmatprep.subr.mxu0 %v724
    %v726 = vand.u32 %v664, 4294901760
    %727 = vmatpush1.msra.mxu0 %v726
    %v728 = vand.u32 %v667, 4294901760
    %729 = vmatprep.subr.mxu0 %v728
    %v730 = vand.u32 %v666, 4294901760
    %731 = vmatpush1.msra.mxu0 %v730
    %732 = vmatprep.subr.mxu0 0.0
    %733 = vmatpush1.msra.mxu0 0.0
    %734 = vmatprep.subr.mxu0 0.0
    %735 = vmatpush1.msra.mxu0 0.0
    %736 = vmatprep.subr.mxu0 0.0
    %737 = vmatpush1.msra.mxu0 0.0
    %738 = vmatprep.subr.mxu0 0.0
    %739 = vmatpush1.msra.mxu0 0.0
    %740 = vmatprep.subr.mxu0 0.0
    %741 = vmatpush1.msra.mxu0 0.0
    %742 = vmatprep.subr.mxu0 0.0
    %743 = vmatpush1.msra.mxu0 0.0
    %744 = vmatprep.subr.mxu0 0.0
    %745 = vmatpush1.msra.mxu0 0.0
    %746 = vmatprep.subr.mxu0 0.0
    %747 = vmatpush1.msra.mxu0 0.0
    %748 = vmatprep.subr.mxu0 0.0
    %749 = vmatpush1.msra.mxu0 0.0
    %750 = vmatprep.subr.mxu0 0.0
    %751 = vmatpush1.msra.mxu0 0.0
    %752 = vmatprep.subr.mxu0 0.0
    %753 = vmatpush1.msra.mxu0 0.0
    %754 = vmatprep.subr.mxu0 0.0
    %755 = vmatpush1.msra.mxu0 0.0
    %756 = vmatprep.subr.mxu0 0.0
    %757 = vmatpush1.msra.mxu0 0.0
    %758 = vmatprep.subr.mxu0 0.0
    %759 = vmatpush1.msra.mxu0 0.0
    %760 = vmatprep.subr.mxu0 0.0
    %761 = vmatpush1.msra.mxu0 0.0
    %762 = vmatprep.subr.mxu0 0.0
    %763 = vmatpush1.msra.mxu0 0.0
    %764 = vmatprep.mubr.f32.mxu0 0.0
    %v765 = vand.u32 %v615, 4294901760
    %v766 = vsub.f32 %v615, %v765
    %v767 = vand.u32 %v766, 4294901760
    %v768 = vsub.f32 %v766, %v767
    %v769 = vand.u32 %v768, 4294901760
    %770 = vmatmul.mubr.f32.gmra.mrb[0].mxu0 %v769
    %v771 = vpop.f32.mrb[0].mxu0
    %v772 = vadd.f32 0.0, %v771
    %v773 = vpop.f32.mrb[0].mxu0
    %v774 = vadd.f32 0.0, %v773
    %775 = vmatprep.mubr.f32.mxu0 0.0
    %v776 = vand.u32 %v621, 4294901760
    %v777 = vsub.f32 %v621, %v776
    %v778 = vand.u32 %v777, 4294901760
    %v779 = vsub.f32 %v777, %v778
    %v780 = vand.u32 %v779, 4294901760
    %781 = vmatmul.mubr.f32.gmra.mrb[0].mxu0 %v780
    %v782 = vpop.f32.mrb[0].mxu0
    %v783 = vadd.f32 0.0, %v782
    %v784 = vpop.f32.mrb[0].mxu0
    %v785 = vadd.f32 0.0, %v784
    %786 = vmatprep.mubr.f32.mxu0 0.0
    %v787 = vand.u32 %v627, 4294901760
    %v788 = vsub.f32 %v627, %v787
    %v789 = vand.u32 %v788, 4294901760
    %v790 = vsub.f32 %v788, %v789
    %v791 = vand.u32 %v790, 4294901760
    %792 = vmatmul.mubr.f32.gmra.mrb[0].mxu0 %v791
    %v793 = vpop.f32.mrb[0].mxu0
    %v794 = vadd.f32 0.0, %v793
    %v795 = vpop.f32.mrb[0].mxu0
    %v796 = vadd.f32 0.0, %v795
    %797 = vmatprep.mubr.f32.mxu0 0.0
    %v798 = vand.u32 %v633, 4294901760
    %v799 = vsub.f32 %v633, %v798
    %v800 = vand.u32 %v799, 4294901760
    %v801 = vsub.f32 %v799, %v800
    %v802 = vand.u32 %v801, 4294901760
    %803 = vmatmul.mubr.f32.gmra.mrb[0].mxu0 %v802
    %v804 = vpop.f32.mrb[0].mxu0
    %v805 = vadd.f32 0.0, %v804
    %v806 = vpop.f32.mrb[0].mxu0
    %v807 = vadd.f32 0.0, %v806
    %808 = vdwg.mxu0
    %v809 = vand.u32 %v637, 4294901760
    %v810 = vsub.f32 %v637, %v809
    %v811 = vand.u32 %v810, 4294901760
    %v812 = vsub.f32 %v810, %v811
    %v813 = vand.u32 %v812, 4294901760
    %814 = vmatprep.subr.mxu0 %v813
    %v815 = vand.u32 %v636, 4294901760
    %v816 = vsub.f32 %v636, %v815
    %v817 = vand.u32 %v816, 4294901760
    %v818 = vsub.f32 %v816, %v817
    %v819 = vand.u32 %v818, 4294901760
    %820 = vmatpush1.msra.mxu0 %v819
    %v821 = vand.u32 %v639, 4294901760
    %v822 = vsub.f32 %v639, %v821
    %v823 = vand.u32 %v822, 4294901760
    %v824 = vsub.f32 %v822, %v823
    %v825 = vand.u32 %v824, 4294901760
    %826 = vmatprep.subr.mxu0 %v825
    %v827 = vand.u32 %v638, 4294901760
    %v828 = vsub.f32 %v638, %v827
    %v829 = vand.u32 %v828, 4294901760
    %v830 = vsub.f32 %v828, %v829
    %v831 = vand.u32 %v830, 4294901760
    %832 = vmatpush1.msra.mxu0 %v831
    %v833 = vand.u32 %v641, 4294901760
    %v834 = vsub.f32 %v641, %v833
    %v835 = vand.u32 %v834, 4294901760
    %v836 = vsub.f32 %v834, %v835
    %v837 = vand.u32 %v836, 4294901760
    %838 = vmatprep.subr.mxu0 %v837
    %v839 = vand.u32 %v640, 4294901760
    %v840 = vsub.f32 %v640, %v839
    %v841 = vand.u32 %v840, 4294901760
    %v842 = vsub.f32 %v840, %v841
    %v843 = vand.u32 %v842, 4294901760
    %844 = vmatpush1.msra.mxu0 %v843
    %v845 = vand.u32 %v643, 4294901760
    %v846 = vsub.f32 %v643, %v845
    %v847 = vand.u32 %v846, 4294901760
    %v848 = vsub.f32 %v846, %v847
    %v849 = vand.u32 %v848, 4294901760
    %850 = vmatprep.subr.mxu0 %v849
    %v851 = vand.u32 %v642, 4294901760
    %v852 = vsub.f32 %v642, %v851
    %v853 = vand.u32 %v852, 4294901760
    %v854 = vsub.f32 %v852, %v853
    %v855 = vand.u32 %v854, 4294901760
    %856 = vmatpush1.msra.mxu0 %v855
    %v857 = vand.u32 %v645, 4294901760
    %v858 = vsub.f32 %v645, %v857
    %v859 = vand.u32 %v858, 4294901760
    %v860 = vsub.f32 %v858, %v859
    %v861 = vand.u32 %v860, 4294901760
    %862 = vmatprep.subr.mxu0 %v861
    %v863 = vand.u32 %v644, 4294901760
    %v864 = vsub.f32 %v644, %v863
    %v865 = vand.u32 %v864, 4294901760
    %v866 = vsub.f32 %v864, %v865
    %v867 = vand.u32 %v866, 4294901760
    %868 = vmatpush1.msra.mxu0 %v867
    %v869 = vand.u32 %v647, 4294901760
    %v870 = vsub.f32 %v647, %v869
    %v871 = vand.u32 %v870, 4294901760
    %v872 = vsub.f32 %v870, %v871
    %v873 = vand.u32 %v872, 4294901760
    %874 = vmatprep.subr.mxu0 %v873
    %v875 = vand.u32 %v646, 4294901760
    %v876 = vsub.f32 %v646, %v875
    %v877 = vand.u32 %v876, 4294901760
    %v878 = vsub.f32 %v876, %v877
    %v879 = vand.u32 %v878, 4294901760
    %880 = vmatpush1.msra.mxu0 %v879
    %v881 = vand.u32 %v649, 4294901760
    %v882 = vsub.f32 %v649, %v881
    %v883 = vand.u32 %v882, 4294901760
    %v884 = vsub.f32 %v882, %v883
    %v885 = vand.u32 %v884, 4294901760
    %886 = vmatprep.subr.mxu0 %v885
    %v887 = vand.u32 %v648, 4294901760
    %v888 = vsub.f32 %v648, %v887
    %v889 = vand.u32 %v888, 4294901760
    %v890 = vsub.f32 %v888, %v889
    %v891 = vand.u32 %v890, 4294901760
    %892 = vmatpush1.msra.mxu0 %v891
    %v893 = vand.u32 %v651, 4294901760
    %v894 = vsub.f32 %v651, %v893
    %v895 = vand.u32 %v894, 4294901760
    %v896 = vsub.f32 %v894, %v895
    %v897 = vand.u32 %v896, 4294901760
    %898 = vmatprep.subr.mxu0 %v897
    %v899 = vand.u32 %v650, 4294901760
    %v900 = vsub.f32 %v650, %v899
    %v901 = vand.u32 %v900, 4294901760
    %v902 = vsub.f32 %v900, %v901
    %v903 = vand.u32 %v902, 4294901760
    %904 = vmatpush1.msra.mxu0 %v903
    %v905 = vand.u32 %v653, 4294901760
    %v906 = vsub.f32 %v653, %v905
    %v907 = vand.u32 %v906, 4294901760
    %v908 = vsub.f32 %v906, %v907
    %v909 = vand.u32 %v908, 4294901760
    %910 = vmatprep.subr.mxu0 %v909
    %v911 = vand.u32 %v652, 4294901760
    %v912 = vsub.f32 %v652, %v911
    %v913 = vand.u32 %v912, 4294901760
    %v914 = vsub.f32 %v912, %v913
    %v915 = vand.u32 %v914, 4294901760
    %916 = vmatpush1.msra.mxu0 %v915
    %v917 = vand.u32 %v655, 4294901760
    %v918 = vsub.f32 %v655, %v917
    %v919 = vand.u32 %v918, 4294901760
    %v920 = vsub.f32 %v918, %v919
    %v921 = vand.u32 %v920, 4294901760
    %922 = vmatprep.subr.mxu0 %v921
    %v923 = vand.u32 %v654, 4294901760
    %v924 = vsub.f32 %v654, %v923
    %v925 = vand.u32 %v924, 4294901760
    %v926 = vsub.f32 %v924, %v925
    %v927 = vand.u32 %v926, 4294901760
    %928 = vmatpush1.msra.mxu0 %v927
    %v929 = vand.u32 %v657, 4294901760
    %v930 = vsub.f32 %v657, %v929
    %v931 = vand.u32 %v930, 4294901760
    %v932 = vsub.f32 %v930, %v931
    %v933 = vand.u32 %v932, 4294901760
    %934 = vmatprep.subr.mxu0 %v933
    %v935 = vand.u32 %v656, 4294901760
    %v936 = vsub.f32 %v656, %v935
    %v937 = vand.u32 %v936, 4294901760
    %v938 = vsub.f32 %v936, %v937
    %v939 = vand.u32 %v938, 4294901760
    %940 = vmatpush1.msra.mxu0 %v939
    %v941 = vand.u32 %v659, 4294901760
    %v942 = vsub.f32 %v659, %v941
    %v943 = vand.u32 %v942, 4294901760
    %v944 = vsub.f32 %v942, %v943
    %v945 = vand.u32 %v944, 4294901760
    %946 = vmatprep.subr.mxu0 %v945
    %v947 = vand.u32 %v658, 4294901760
    %v948 = vsub.f32 %v658, %v947
    %v949 = vand.u32 %v948, 4294901760
    %v950 = vsub.f32 %v948, %v949
    %v951 = vand.u32 %v950, 4294901760
    %952 = vmatpush1.msra.mxu0 %v951
    %v953 = vand.u32 %v661, 4294901760
    %v954 = vsub.f32 %v661, %v953
    %v955 = vand.u32 %v954, 4294901760
    %v956 = vsub.f32 %v954, %v955
    %v957 = vand.u32 %v956, 4294901760
    %958 = vmatprep.subr.mxu0 %v957
    %v959 = vand.u32 %v660, 4294901760
    %v960 = vsub.f32 %v660, %v959
    %v961 = vand.u32 %v960, 4294901760
    %v962 = vsub.f32 %v960, %v961
    %v963 = vand.u32 %v962, 4294901760
    %964 = vmatpush1.msra.mxu0 %v963
    %v965 = vand.u32 %v663, 4294901760
    %v966 = vsub.f32 %v663, %v965
    %v967 = vand.u32 %v966, 4294901760
    %v968 = vsub.f32 %v966, %v967
    %v969 = vand.u32 %v968, 4294901760
    %970 = vmatprep.subr.mxu0 %v969
    %v971 = vand.u32 %v662, 4294901760
    %v972 = vsub.f32 %v662, %v971
    %v973 = vand.u32 %v972, 4294901760
    %v974 = vsub.f32 %v972, %v973
    %v975 = vand.u32 %v974, 4294901760
    %976 = vmatpush1.msra.mxu0 %v975
    %v977 = vand.u32 %v665, 4294901760
    %v978 = vsub.f32 %v665, %v977
    %v979 = vand.u32 %v978, 4294901760
    %v980 = vsub.f32 %v978, %v979
    %v981 = vand.u32 %v980, 4294901760
    %982 = vmatprep.subr.mxu0 %v981
    %v983 = vand.u32 %v664, 4294901760
    %v984 = vsub.f32 %v664, %v983
    %v985 = vand.u32 %v984, 4294901760
    %v986 = vsub.f32 %v984, %v985
    %v987 = vand.u32 %v986, 4294901760
    %988 = vmatpush1.msra.mxu0 %v987
    %v989 = vand.u32 %v667, 4294901760
    %v990 = vsub.f32 %v667, %v989
    %v991 = vand.u32 %v990, 4294901760
    %v992 = vsub.f32 %v990, %v991
    %v993 = vand.u32 %v992, 4294901760
    %994 = vmatprep.subr.mxu0 %v993
    %v995 = vand.u32 %v666, 4294901760
    %v996 = vsub.f32 %v666, %v995
    %v997 = vand.u32 %v996, 4294901760
    %v998 = vsub.f32 %v996, %v997
    %v999 = vand.u32 %v998, 4294901760
    %1000 = vmatpush1.msra.mxu0 %v999
    %1001 = vmatprep.subr.mxu0 0.0
    %1002 = vmatpush1.msra.mxu0 0.0
    %1003 = vmatprep.subr.mxu0 0.0
    %1004 = vmatpush1.msra.mxu0 0.0
    %1005 = vmatprep.subr.mxu0 0.0
    %1006 = vmatpush1.msra.mxu0 0.0
    %1007 = vmatprep.subr.mxu0 0.0
    %1008 = vmatpush1.msra.mxu0 0.0
    %1009 = vmatprep.subr.mxu0 0.0
    %1010 = vmatpush1.msra.mxu0 0.0
    %1011 = vmatprep.subr.mxu0 0.0
    %1012 = vmatpush1.msra.mxu0 0.0
    %1013 = vmatprep.subr.mxu0 0.0
    %1014 = vmatpush1.msra.mxu0 0.0
    %1015 = vmatprep.subr.mxu0 0.0
    %1016 = vmatpush1.msra.mxu0 0.0
    %1017 = vmatprep.subr.mxu0 0.0
    %1018 = vmatpush1.msra.mxu0 0.0
    %1019 = vmatprep.subr.mxu0 0.0
    %1020 = vmatpush1.msra.mxu0 0.0
    %1021 = vmatprep.subr.mxu0 0.0
    %1022 = vmatpush1.msra.mxu0 0.0
    %1023 = vmatprep.subr.mxu0 0.0
    %1024 = vmatpush1.msra.mxu0 0.0
    %1025 = vmatprep.subr.mxu0 0.0
    %1026 = vmatpush1.msra.mxu0 0.0
    %1027 = vmatprep.subr.mxu0 0.0
    %1028 = vmatpush1.msra.mxu0 0.0
    %1029 = vmatprep.subr.mxu0 0.0
    %1030 = vmatpush1.msra.mxu0 0.0
    %1031 = vmatprep.subr.mxu0 0.0
    %1032 = vmatpush1.msra.mxu0 0.0
    %1033 = vmatprep.mubr.f32.mxu0 0.0
    %v1034 = vand.u32 %v615, 4294901760
    %1035 = vmatmul.mubr.f32.gmra.mrb[0].mxu0 %v1034
    %v1036 = vpop.f32.mrb[0].mxu0
    %v1037 = vadd.f32 %v772, %v1036
    %v1038 = vpop.f32.mrb[0].mxu0
    %v1039 = vadd.f32 %v774, %v1038
    %1040 = vmatprep.mubr.f32.mxu0 0.0
    %v1041 = vand.u32 %v621, 4294901760
    %1042 = vmatmul.mubr.f32.gmra.mrb[0].mxu0 %v1041
    %v1043 = vpop.f32.mrb[0].mxu0
    %v1044 = vadd.f32 %v783, %v1043
    %v1045 = vpop.f32.mrb[0].mxu0
    %v1046 = vadd.f32 %v785, %v1045
    %1047 = vmatprep.mubr.f32.mxu0 0.0
    %v1048 = vand.u32 %v627, 4294901760
    %1049 = vmatmul.mubr.f32.gmra.mrb[0].mxu0 %v1048
    %v1050 = vpop.f32.mrb[0].mxu0
    %v1051 = vadd.f32 %v794, %v1050
    %v1052 = vpop.f32.mrb[0].mxu0
    %v1053 = vadd.f32 %v796, %v1052
    %1054 = vmatprep.mubr.f32.mxu0 0.0
    %v1055 = vand.u32 %v633, 4294901760
    %1056 = vmatmul.mubr.f32.gmra.mrb[0].mxu0 %v1055
    %v1057 = vpop.f32.mrb[0].mxu0
    %v1058 = vadd.f32 %v805, %v1057
    %v1059 = vpop.f32.mrb[0].mxu0
    %v1060 = vadd.f32 %v807, %v1059
    %1061 = vdwg.mxu0
    %v1062 = vand.u32 %v637, 4294901760
    %v1063 = vsub.f32 %v637, %v1062
    %1064 = vmatprep.subr.mxu0 %v1063
    %v1065 = vand.u32 %v636, 4294901760
    %v1066 = vsub.f32 %v636, %v1065
    %1067 = vmatpush1.msra.mxu0 %v1066
    %v1068 = vand.u32 %v639, 4294901760
    %v1069 = vsub.f32 %v639, %v1068
    %1070 = vmatprep.subr.mxu0 %v1069
    %v1071 = vand.u32 %v638, 4294901760
    %v1072 = vsub.f32 %v638, %v1071
    %1073 = vmatpush1.msra.mxu0 %v1072
    %v1074 = vand.u32 %v641, 4294901760
    %v1075 = vsub.f32 %v641, %v1074
    %1076 = vmatprep.subr.mxu0 %v1075
    %v1077 = vand.u32 %v640, 4294901760
    %v1078 = vsub.f32 %v640, %v1077
    %1079 = vmatpush1.msra.mxu0 %v1078
    %v1080 = vand.u32 %v643, 4294901760
    %v1081 = vsub.f32 %v643, %v1080
    %1082 = vmatprep.subr.mxu0 %v1081
    %v1083 = vand.u32 %v642, 4294901760
    %v1084 = vsub.f32 %v642, %v1083
    %1085 = vmatpush1.msra.mxu0 %v1084
    %v1086 = vand.u32 %v645, 4294901760
    %v1087 = vsub.f32 %v645, %v1086
    %1088 = vmatprep.subr.mxu0 %v1087
    %v1089 = vand.u32 %v644, 4294901760
    %v1090 = vsub.f32 %v644, %v1089
    %1091 = vmatpush1.msra.mxu0 %v1090
    %v1092 = vand.u32 %v647, 4294901760
    %v1093 = vsub.f32 %v647, %v1092
    %1094 = vmatprep.subr.mxu0 %v1093
    %v1095 = vand.u32 %v646, 4294901760
    %v1096 = vsub.f32 %v646, %v1095
    %1097 = vmatpush1.msra.mxu0 %v1096
    %v1098 = vand.u32 %v649, 4294901760
    %v1099 = vsub.f32 %v649, %v1098
    %1100 = vmatprep.subr.mxu0 %v1099
    %v1101 = vand.u32 %v648, 4294901760
    %v1102 = vsub.f32 %v648, %v1101
    %1103 = vmatpush1.msra.mxu0 %v1102
    %v1104 = vand.u32 %v651, 4294901760
    %v1105 = vsub.f32 %v651, %v1104
    %1106 = vmatprep.subr.mxu0 %v1105
    %v1107 = vand.u32 %v650, 4294901760
    %v1108 = vsub.f32 %v650, %v1107
    %1109 = vmatpush1.msra.mxu0 %v1108
    %v1110 = vand.u32 %v653, 4294901760
    %v1111 = vsub.f32 %v653, %v1110
    %1112 = vmatprep.subr.mxu0 %v1111
    %v1113 = vand.u32 %v652, 4294901760
    %v1114 = vsub.f32 %v652, %v1113
    %1115 = vmatpush1.msra.mxu0 %v1114
    %v1116 = vand.u32 %v655, 4294901760
    %v1117 = vsub.f32 %v655, %v1116
    %1118 = vmatprep.subr.mxu0 %v1117
    %v1119 = vand.u32 %v654, 4294901760
    %v1120 = vsub.f32 %v654, %v1119
    %1121 = vmatpush1.msra.mxu0 %v1120
    %v1122 = vand.u32 %v657, 4294901760
    %v1123 = vsub.f32 %v657, %v1122
    %1124 = vmatprep.subr.mxu0 %v1123
    %v1125 = vand.u32 %v656, 4294901760
    %v1126 = vsub.f32 %v656, %v1125
    %1127 = vmatpush1.msra.mxu0 %v1126
    %v1128 = vand.u32 %v659, 4294901760
    %v1129 = vsub.f32 %v659, %v1128
    %1130 = vmatprep.subr.mxu0 %v1129
    %v1131 = vand.u32 %v658, 4294901760
    %v1132 = vsub.f32 %v658, %v1131
    %1133 = vmatpush1.msra.mxu0 %v1132
    %v1134 = vand.u32 %v661, 4294901760
    %v1135 = vsub.f32 %v661, %v1134
    %1136 = vmatprep.subr.mxu0 %v1135
    %v1137 = vand.u32 %v660, 4294901760
    %v1138 = vsub.f32 %v660, %v1137
    %1139 = vmatpush1.msra.mxu0 %v1138
    %v1140 = vand.u32 %v663, 4294901760
    %v1141 = vsub.f32 %v663, %v1140
    %1142 = vmatprep.subr.mxu0 %v1141
    %v1143 = vand.u32 %v662, 4294901760
    %v1144 = vsub.f32 %v662, %v1143
    %1145 = vmatpush1.msra.mxu0 %v1144
    %v1146 = vand.u32 %v665, 4294901760
    %v1147 = vsub.f32 %v665, %v1146
    %1148 = vmatprep.subr.mxu0 %v1147
    %v1149 = vand.u32 %v664, 4294901760
    %v1150 = vsub.f32 %v664, %v1149
    %1151 = vmatpush1.msra.mxu0 %v1150
    %v1152 = vand.u32 %v667, 4294901760
    %v1153 = vsub.f32 %v667, %v1152
    %1154 = vmatprep.subr.mxu0 %v1153
    %v1155 = vand.u32 %v666, 4294901760
    %v1156 = vsub.f32 %v666, %v1155
    %1157 = vmatpush1.msra.mxu0 %v1156
    %1158 = vmatprep.subr.mxu0 0.0
    %1159 = vmatpush1.msra.mxu0 0.0
    %1160 = vmatprep.subr.mxu0 0.0
    %1161 = vmatpush1.msra.mxu0 0.0
    %1162 = vmatprep.subr.mxu0 0.0
    %1163 = vmatpush1.msra.mxu0 0.0
    %1164 = vmatprep.subr.mxu0 0.0
    %1165 = vmatpush1.msra.mxu0 0.0
    %1166 = vmatprep.subr.mxu0 0.0
    %1167 = vmatpush1.msra.mxu0 0.0
    %1168 = vmatprep.subr.mxu0 0.0
    %1169 = vmatpush1.msra.mxu0 0.0
    %1170 = vmatprep.subr.mxu0 0.0
    %1171 = vmatpush1.msra.mxu0 0.0
    %1172 = vmatprep.subr.mxu0 0.0
    %1173 = vmatpush1.msra.mxu0 0.0
    %1174 = vmatprep.subr.mxu0 0.0
    %1175 = vmatpush1.msra.mxu0 0.0
    %1176 = vmatprep.subr.mxu0 0.0
    %1177 = vmatpush1.msra.mxu0 0.0
    %1178 = vmatprep.subr.mxu0 0.0
    %1179 = vmatpush1.msra.mxu0 0.0
    %1180 = vmatprep.subr.mxu0 0.0
    %1181 = vmatpush1.msra.mxu0 0.0
    %1182 = vmatprep.subr.mxu0 0.0
    %1183 = vmatpush1.msra.mxu0 0.0
    %1184 = vmatprep.subr.mxu0 0.0
    %1185 = vmatpush1.msra.mxu0 0.0
    %1186 = vmatprep.subr.mxu0 0.0
    %1187 = vmatpush1.msra.mxu0 0.0
    %1188 = vmatprep.subr.mxu0 0.0
    %1189 = vmatpush1.msra.mxu0 0.0
    %1190 = vmatprep.mubr.f32.mxu0 0.0
    %v1191 = vand.u32 %v615, 4294901760
    %v1192 = vsub.f32 %v615, %v1191
    %1193 = vmatmul.mubr.f32.gmra.mrb[0].mxu0 %v1192
    %v1194 = vpop.f32.mrb[0].mxu0
    %v1195 = vadd.f32 %v1037, %v1194
    %v1196 = vpop.f32.mrb[0].mxu0
    %v1197 = vadd.f32 %v1039, %v1196
    %1198 = vmatprep.mubr.f32.mxu0 0.0
    %v1199 = vand.u32 %v621, 4294901760
    %v1200 = vsub.f32 %v621, %v1199
    %1201 = vmatmul.mubr.f32.gmra.mrb[0].mxu0 %v1200
    %v1202 = vpop.f32.mrb[0].mxu0
    %v1203 = vadd.f32 %v1044, %v1202
    %v1204 = vpop.f32.mrb[0].mxu0
    %v1205 = vadd.f32 %v1046, %v1204
    %1206 = vmatprep.mubr.f32.mxu0 0.0
    %v1207 = vand.u32 %v627, 4294901760
    %v1208 = vsub.f32 %v627, %v1207
    %1209 = vmatmul.mubr.f32.gmra.mrb[0].mxu0 %v1208
    %v1210 = vpop.f32.mrb[0].mxu0
    %v1211 = vadd.f32 %v1051, %v1210
    %v1212 = vpop.f32.mrb[0].mxu0
    %v1213 = vadd.f32 %v1053, %v1212
    %1214 = vmatprep.mubr.f32.mxu0 0.0
    %v1215 = vand.u32 %v633, 4294901760
    %v1216 = vsub.f32 %v633, %v1215
    %1217 = vmatmul.mubr.f32.gmra.mrb[0].mxu0 %v1216
    %v1218 = vpop.f32.mrb[0].mxu0
    %v1219 = vadd.f32 %v1058, %v1218
    %v1220 = vpop.f32.mrb[0].mxu0
    %v1221 = vadd.f32 %v1060, %v1220
    %1222 = vdwg.mxu0
    %v1223 = vand.u32 %v637, 4294901760
    %1224 = vmatprep.subr.mxu0 %v1223
    %v1225 = vand.u32 %v636, 4294901760
    %1226 = vmatpush1.msra.mxu0 %v1225
    %v1227 = vand.u32 %v639, 4294901760
    %1228 = vmatprep.subr.mxu0 %v1227
    %v1229 = vand.u32 %v638, 4294901760
    %1230 = vmatpush1.msra.mxu0 %v1229
    %v1231 = vand.u32 %v641, 4294901760
    %1232 = vmatprep.subr.mxu0 %v1231
    %v1233 = vand.u32 %v640, 4294901760
    %1234 = vmatpush1.msra.mxu0 %v1233
    %v1235 = vand.u32 %v643, 4294901760
    %1236 = vmatprep.subr.mxu0 %v1235
    %v1237 = vand.u32 %v642, 4294901760
    %1238 = vmatpush1.msra.mxu0 %v1237
    %v1239 = vand.u32 %v645, 4294901760
    %1240 = vmatprep.subr.mxu0 %v1239
    %v1241 = vand.u32 %v644, 4294901760
    %1242 = vmatpush1.msra.mxu0 %v1241
    %v1243 = vand.u32 %v647, 4294901760
    %1244 = vmatprep.subr.mxu0 %v1243
    %v1245 = vand.u32 %v646, 4294901760
    %1246 = vmatpush1.msra.mxu0 %v1245
    %v1247 = vand.u32 %v649, 4294901760
    %1248 = vmatprep.subr.mxu0 %v1247
    %v1249 = vand.u32 %v648, 4294901760
    %1250 = vmatpush1.msra.mxu0 %v1249
    %v1251 = vand.u32 %v651, 4294901760
    %1252 = vmatprep.subr.mxu0 %v1251
    %v1253 = vand.u32 %v650, 4294901760
    %1254 = vmatpush1.msra.mxu0 %v1253
    %v1255 = vand.u32 %v653, 4294901760
    %1256 = vmatprep.subr.mxu0 %v1255
    %v1257 = vand.u32 %v652, 4294901760
    %1258 = vmatpush1.msra.mxu0 %v1257
    %v1259 = vand.u32 %v655, 4294901760
    %1260 = vmatprep.subr.mxu0 %v1259
    %v1261 = vand.u32 %v654, 4294901760
    %1262 = vmatpush1.msra.mxu0 %v1261
    %v1263 = vand.u32 %v657, 4294901760
    %1264 = vmatprep.subr.mxu0 %v1263
    %v1265 = vand.u32 %v656, 4294901760
    %1266 = vmatpush1.msra.mxu0 %v1265
    %v1267 = vand.u32 %v659, 4294901760
    %1268 = vmatprep.subr.mxu0 %v1267
    %v1269 = vand.u32 %v658, 4294901760
    %1270 = vmatpush1.msra.mxu0 %v1269
    %v1271 = vand.u32 %v661, 4294901760
    %1272 = vmatprep.subr.mxu0 %v1271
    %v1273 = vand.u32 %v660, 4294901760
    %1274 = vmatpush1.msra.mxu0 %v1273
    %v1275 = vand.u32 %v663, 4294901760
    %1276 = vmatprep.subr.mxu0 %v1275
    %v1277 = vand.u32 %v662, 4294901760
    %1278 = vmatpush1.msra.mxu0 %v1277
    %v1279 = vand.u32 %v665, 4294901760
    %1280 = vmatprep.subr.mxu0 %v1279
    %v1281 = vand.u32 %v664, 4294901760
    %1282 = vmatpush1.msra.mxu0 %v1281
    %v1283 = vand.u32 %v667, 4294901760
    %1284 = vmatprep.subr.mxu0 %v1283
    %v1285 = vand.u32 %v666, 4294901760
    %1286 = vmatpush1.msra.mxu0 %v1285
    %1287 = vmatprep.subr.mxu0 0.0
    %1288 = vmatpush1.msra.mxu0 0.0
    %1289 = vmatprep.subr.mxu0 0.0
    %1290 = vmatpush1.msra.mxu0 0.0
    %1291 = vmatprep.subr.mxu0 0.0
    %1292 = vmatpush1.msra.mxu0 0.0
    %1293 = vmatprep.subr.mxu0 0.0
    %1294 = vmatpush1.msra.mxu0 0.0
    %1295 = vmatprep.subr.mxu0 0.0
    %1296 = vmatpush1.msra.mxu0 0.0
    %1297 = vmatprep.subr.mxu0 0.0
    %1298 = vmatpush1.msra.mxu0 0.0
    %1299 = vmatprep.subr.mxu0 0.0
    %1300 = vmatpush1.msra.mxu0 0.0
    %1301 = vmatprep.subr.mxu0 0.0
    %1302 = vmatpush1.msra.mxu0 0.0
    %1303 = vmatprep.subr.mxu0 0.0
    %1304 = vmatpush1.msra.mxu0 0.0
    %1305 = vmatprep.subr.mxu0 0.0
    %1306 = vmatpush1.msra.mxu0 0.0
    %1307 = vmatprep.subr.mxu0 0.0
    %1308 = vmatpush1.msra.mxu0 0.0
    %1309 = vmatprep.subr.mxu0 0.0
    %1310 = vmatpush1.msra.mxu0 0.0
    %1311 = vmatprep.subr.mxu0 0.0
    %1312 = vmatpush1.msra.mxu0 0.0
    %1313 = vmatprep.subr.mxu0 0.0
    %1314 = vmatpush1.msra.mxu0 0.0
    %1315 = vmatprep.subr.mxu0 0.0
    %1316 = vmatpush1.msra.mxu0 0.0
    %1317 = vmatprep.subr.mxu0 0.0
    %1318 = vmatpush1.msra.mxu0 0.0
    %1319 = vmatprep.mubr.f32.mxu0 0.0
    %v1320 = vand.u32 %v615, 4294901760
    %v1321 = vsub.f32 %v615, %v1320
    %v1322 = vand.u32 %v1321, 4294901760
    %1323 = vmatmul.mubr.f32.gmra.mrb[0].mxu0 %v1322
    %v1324 = vpop.f32.mrb[0].mxu0
    %v1325 = vadd.f32 %v1195, %v1324
    %v1326 = vpop.f32.mrb[0].mxu0
    %v1327 = vadd.f32 %v1197, %v1326
    %1328 = vmatprep.mubr.f32.mxu0 0.0
    %v1329 = vand.u32 %v621, 4294901760
    %v1330 = vsub.f32 %v621, %v1329
    %v1331 = vand.u32 %v1330, 4294901760
    %1332 = vmatmul.mubr.f32.gmra.mrb[0].mxu0 %v1331
    %v1333 = vpop.f32.mrb[0].mxu0
    %v1334 = vadd.f32 %v1203, %v1333
    %v1335 = vpop.f32.mrb[0].mxu0
    %v1336 = vadd.f32 %v1205, %v1335
    %1337 = vmatprep.mubr.f32.mxu0 0.0
    %v1338 = vand.u32 %v627, 4294901760
    %v1339 = vsub.f32 %v627, %v1338
    %v1340 = vand.u32 %v1339, 4294901760
    %1341 = vmatmul.mubr.f32.gmra.mrb[0].mxu0 %v1340
    %v1342 = vpop.f32.mrb[0].mxu0
    %v1343 = vadd.f32 %v1211, %v1342
    %v1344 = vpop.f32.mrb[0].mxu0
    %v1345 = vadd.f32 %v1213, %v1344
    %1346 = vmatprep.mubr.f32.mxu0 0.0
    %v1347 = vand.u32 %v633, 4294901760
    %v1348 = vsub.f32 %v633, %v1347
    %v1349 = vand.u32 %v1348, 4294901760
    %1350 = vmatmul.mubr.f32.gmra.mrb[0].mxu0 %v1349
    %v1351 = vpop.f32.mrb[0].mxu0
    %v1352 = vadd.f32 %v1219, %v1351
    %v1353 = vpop.f32.mrb[0].mxu0
    %v1354 = vadd.f32 %v1221, %v1353
    %1355 = vdwg.mxu0
    %v1356 = vand.u32 %v637, 4294901760
    %v1357 = vsub.f32 %v637, %v1356
    %v1358 = vand.u32 %v1357, 4294901760
    %1359 = vmatprep.subr.mxu0 %v1358
    %v1360 = vand.u32 %v636, 4294901760
    %v1361 = vsub.f32 %v636, %v1360
    %v1362 = vand.u32 %v1361, 4294901760
    %1363 = vmatpush1.msra.mxu0 %v1362
    %v1364 = vand.u32 %v639, 4294901760
    %v1365 = vsub.f32 %v639, %v1364
    %v1366 = vand.u32 %v1365, 4294901760
    %1367 = vmatprep.subr.mxu0 %v1366
    %v1368 = vand.u32 %v638, 4294901760
    %v1369 = vsub.f32 %v638, %v1368
    %v1370 = vand.u32 %v1369, 4294901760
    %1371 = vmatpush1.msra.mxu0 %v1370
    %v1372 = vand.u32 %v641, 4294901760
    %v1373 = vsub.f32 %v641, %v1372
    %v1374 = vand.u32 %v1373, 4294901760
    %1375 = vmatprep.subr.mxu0 %v1374
    %v1376 = vand.u32 %v640, 4294901760
    %v1377 = vsub.f32 %v640, %v1376
    %v1378 = vand.u32 %v1377, 4294901760
    %1379 = vmatpush1.msra.mxu0 %v1378
    %v1380 = vand.u32 %v643, 4294901760
    %v1381 = vsub.f32 %v643, %v1380
    %v1382 = vand.u32 %v1381, 4294901760
    %1383 = vmatprep.subr.mxu0 %v1382
    %v1384 = vand.u32 %v642, 4294901760
    %v1385 = vsub.f32 %v642, %v1384
    %v1386 = vand.u32 %v1385, 4294901760
    %1387 = vmatpush1.msra.mxu0 %v1386
    %v1388 = vand.u32 %v645, 4294901760
    %v1389 = vsub.f32 %v645, %v1388
    %v1390 = vand.u32 %v1389, 4294901760
    %1391 = vmatprep.subr.mxu0 %v1390
    %v1392 = vand.u32 %v644, 4294901760
    %v1393 = vsub.f32 %v644, %v1392
    %v1394 = vand.u32 %v1393, 4294901760
    %1395 = vmatpush1.msra.mxu0 %v1394
    %v1396 = vand.u32 %v647, 4294901760
    %v1397 = vsub.f32 %v647, %v1396
    %v1398 = vand.u32 %v1397, 4294901760
    %1399 = vmatprep.subr.mxu0 %v1398
    %v1400 = vand.u32 %v646, 4294901760
    %v1401 = vsub.f32 %v646, %v1400
    %v1402 = vand.u32 %v1401, 4294901760
    %1403 = vmatpush1.msra.mxu0 %v1402
    %v1404 = vand.u32 %v649, 4294901760
    %v1405 = vsub.f32 %v649, %v1404
    %v1406 = vand.u32 %v1405, 4294901760
    %1407 = vmatprep.subr.mxu0 %v1406
    %v1408 = vand.u32 %v648, 4294901760
    %v1409 = vsub.f32 %v648, %v1408
    %v1410 = vand.u32 %v1409, 4294901760
    %1411 = vmatpush1.msra.mxu0 %v1410
    %v1412 = vand.u32 %v651, 4294901760
    %v1413 = vsub.f32 %v651, %v1412
    %v1414 = vand.u32 %v1413, 4294901760
    %1415 = vmatprep.subr.mxu0 %v1414
    %v1416 = vand.u32 %v650, 4294901760
    %v1417 = vsub.f32 %v650, %v1416
    %v1418 = vand.u32 %v1417, 4294901760
    %1419 = vmatpush1.msra.mxu0 %v1418
    %v1420 = vand.u32 %v653, 4294901760
    %v1421 = vsub.f32 %v653, %v1420
    %v1422 = vand.u32 %v1421, 4294901760
    %1423 = vmatprep.subr.mxu0 %v1422
    %v1424 = vand.u32 %v652, 4294901760
    %v1425 = vsub.f32 %v652, %v1424
    %v1426 = vand.u32 %v1425, 4294901760
    %1427 = vmatpush1.msra.mxu0 %v1426
    %v1428 = vand.u32 %v655, 4294901760
    %v1429 = vsub.f32 %v655, %v1428
    %v1430 = vand.u32 %v1429, 4294901760
    %1431 = vmatprep.subr.mxu0 %v1430
    %v1432 = vand.u32 %v654, 4294901760
    %v1433 = vsub.f32 %v654, %v1432
    %v1434 = vand.u32 %v1433, 4294901760
    %1435 = vmatpush1.msra.mxu0 %v1434
    %v1436 = vand.u32 %v657, 4294901760
    %v1437 = vsub.f32 %v657, %v1436
    %v1438 = vand.u32 %v1437, 4294901760
    %1439 = vmatprep.subr.mxu0 %v1438
    %v1440 = vand.u32 %v656, 4294901760
    %v1441 = vsub.f32 %v656, %v1440
    %v1442 = vand.u32 %v1441, 4294901760
    %1443 = vmatpush1.msra.mxu0 %v1442
    %v1444 = vand.u32 %v659, 4294901760
    %v1445 = vsub.f32 %v659, %v1444
    %v1446 = vand.u32 %v1445, 4294901760
    %1447 = vmatprep.subr.mxu0 %v1446
    %v1448 = vand.u32 %v658, 4294901760
    %v1449 = vsub.f32 %v658, %v1448
    %v1450 = vand.u32 %v1449, 4294901760
    %1451 = vmatpush1.msra.mxu0 %v1450
    %v1452 = vand.u32 %v661, 4294901760
    %v1453 = vsub.f32 %v661, %v1452
    %v1454 = vand.u32 %v1453, 4294901760
    %1455 = vmatprep.subr.mxu0 %v1454
    %v1456 = vand.u32 %v660, 4294901760
    %v1457 = vsub.f32 %v660, %v1456
    %v1458 = vand.u32 %v1457, 4294901760
    %1459 = vmatpush1.msra.mxu0 %v1458
    %v1460 = vand.u32 %v663, 4294901760
    %v1461 = vsub.f32 %v663, %v1460
    %v1462 = vand.u32 %v1461, 4294901760
    %1463 = vmatprep.subr.mxu0 %v1462
    %v1464 = vand.u32 %v662, 4294901760
    %v1465 = vsub.f32 %v662, %v1464
    %v1466 = vand.u32 %v1465, 4294901760
    %1467 = vmatpush1.msra.mxu0 %v1466
    %v1468 = vand.u32 %v665, 4294901760
    %v1469 = vsub.f32 %v665, %v1468
    %v1470 = vand.u32 %v1469, 4294901760
    %1471 = vmatprep.subr.mxu0 %v1470
    %v1472 = vand.u32 %v664, 4294901760
    %v1473 = vsub.f32 %v664, %v1472
    %v1474 = vand.u32 %v1473, 4294901760
    %1475 = vmatpush1.msra.mxu0 %v1474
    %v1476 = vand.u32 %v667, 4294901760
    %v1477 = vsub.f32 %v667, %v1476
    %v1478 = vand.u32 %v1477, 4294901760
    %1479 = vmatprep.subr.mxu0 %v1478
    %v1480 = vand.u32 %v666, 4294901760
    %v1481 = vsub.f32 %v666, %v1480
    %v1482 = vand.u32 %v1481, 4294901760
    %1483 = vmatpush1.msra.mxu0 %v1482
    %1484 = vmatprep.subr.mxu0 0.0
    %1485 = vmatpush1.msra.mxu0 0.0
    %1486 = vmatprep.subr.mxu0 0.0
    %1487 = vmatpush1.msra.mxu0 0.0
    %1488 = vmatprep.subr.mxu0 0.0
    %1489 = vmatpush1.msra.mxu0 0.0
    %1490 = vmatprep.subr.mxu0 0.0
    %1491 = vmatpush1.msra.mxu0 0.0
    %1492 = vmatprep.subr.mxu0 0.0
    %1493 = vmatpush1.msra.mxu0 0.0
    %1494 = vmatprep.subr.mxu0 0.0
    %1495 = vmatpush1.msra.mxu0 0.0
    %1496 = vmatprep.subr.mxu0 0.0
    %1497 = vmatpush1.msra.mxu0 0.0
    %1498 = vmatprep.subr.mxu0 0.0
    %1499 = vmatpush1.msra.mxu0 0.0
    %1500 = vmatprep.subr.mxu0 0.0
    %1501 = vmatpush1.msra.mxu0 0.0
    %1502 = vmatprep.subr.mxu0 0.0
    %1503 = vmatpush1.msra.mxu0 0.0
    %1504 = vmatprep.subr.mxu0 0.0
    %1505 = vmatpush1.msra.mxu0 0.0
    %1506 = vmatprep.subr.mxu0 0.0
    %1507 = vmatpush1.msra.mxu0 0.0
    %1508 = vmatprep.subr.mxu0 0.0
    %1509 = vmatpush1.msra.mxu0 0.0
    %1510 = vmatprep.subr.mxu0 0.0
    %1511 = vmatpush1.msra.mxu0 0.0
    %1512 = vmatprep.subr.mxu0 0.0
    %1513 = vmatpush1.msra.mxu0 0.0
    %1514 = vmatprep.subr.mxu0 0.0
    %1515 = vmatpush1.msra.mxu0 0.0
    %1516 = vmatprep.mubr.f32.mxu0 0.0
    %v1517 = vand.u32 %v615, 4294901760
    %1518 = vmatmul.mubr.f32.gmra.mrb[0].mxu0 %v1517
    %v1519 = vpop.f32.mrb[0].mxu0
    %v1520 = vadd.f32 %v1325, %v1519
    %v1521 = vpop.f32.mrb[0].mxu0
    %v1522 = vadd.f32 %v1327, %v1521
    %1523 = vmatprep.mubr.f32.mxu0 0.0
    %v1524 = vand.u32 %v621, 4294901760
    %1525 = vmatmul.mubr.f32.gmra.mrb[0].mxu0 %v1524
    %v1526 = vpop.f32.mrb[0].mxu0
    %v1527 = vadd.f32 %v1334, %v1526
    %v1528 = vpop.f32.mrb[0].mxu0
    %v1529 = vadd.f32 %v1336, %v1528
    %1530 = vmatprep.mubr.f32.mxu0 0.0
    %v1531 = vand.u32 %v627, 4294901760
    %1532 = vmatmul.mubr.f32.gmra.mrb[0].mxu0 %v1531
    %v1533 = vpop.f32.mrb[0].mxu0
    %v1534 = vadd.f32 %v1343, %v1533
    %v1535 = vpop.f32.mrb[0].mxu0
    %v1536 = vadd.f32 %v1345, %v1535
    %1537 = vmatprep.mubr.f32.mxu0 0.0
    %v1538 = vand.u32 %v633, 4294901760
    %1539 = vmatmul.mubr.f32.gmra.mrb[0].mxu0 %v1538
    %v1540 = vpop.f32.mrb[0].mxu0
    %v1541 = vadd.f32 %v1352, %v1540
    %v1542 = vpop.f32.mrb[0].mxu0
    %v1543 = vadd.f32 %v1354, %v1542
    %1544 = vdwg.mxu0
    %v1545 = vand.u32 %v637, 4294901760
    %1546 = vmatprep.subr.mxu0 %v1545
    %v1547 = vand.u32 %v636, 4294901760
    %1548 = vmatpush1.msra.mxu0 %v1547
    %v1549 = vand.u32 %v639, 4294901760
    %1550 = vmatprep.subr.mxu0 %v1549
    %v1551 = vand.u32 %v638, 4294901760
    %1552 = vmatpush1.msra.mxu0 %v1551
    %v1553 = vand.u32 %v641, 4294901760
    %1554 = vmatprep.subr.mxu0 %v1553
    %v1555 = vand.u32 %v640, 4294901760
    %1556 = vmatpush1.msra.mxu0 %v1555
    %v1557 = vand.u32 %v643, 4294901760
    %1558 = vmatprep.subr.mxu0 %v1557
    %v1559 = vand.u32 %v642, 4294901760
    %1560 = vmatpush1.msra.mxu0 %v1559
    %v1561 = vand.u32 %v645, 4294901760
    %1562 = vmatprep.subr.mxu0 %v1561
    %v1563 = vand.u32 %v644, 4294901760
    %1564 = vmatpush1.msra.mxu0 %v1563
    %v1565 = vand.u32 %v647, 4294901760
    %1566 = vmatprep.subr.mxu0 %v1565
    %v1567 = vand.u32 %v646, 4294901760
    %1568 = vmatpush1.msra.mxu0 %v1567
    %v1569 = vand.u32 %v649, 4294901760
    %1570 = vmatprep.subr.mxu0 %v1569
    %v1571 = vand.u32 %v648, 4294901760
    %1572 = vmatpush1.msra.mxu0 %v1571
    %v1573 = vand.u32 %v651, 4294901760
    %1574 = vmatprep.subr.mxu0 %v1573
    %v1575 = vand.u32 %v650, 4294901760
    %1576 = vmatpush1.msra.mxu0 %v1575
    %v1577 = vand.u32 %v653, 4294901760
    %1578 = vmatprep.subr.mxu0 %v1577
    %v1579 = vand.u32 %v652, 4294901760
    %1580 = vmatpush1.msra.mxu0 %v1579
    %v1581 = vand.u32 %v655, 4294901760
    %1582 = vmatprep.subr.mxu0 %v1581
    %v1583 = vand.u32 %v654, 4294901760
    %1584 = vmatpush1.msra.mxu0 %v1583
    %v1585 = vand.u32 %v657, 4294901760
    %1586 = vmatprep.subr.mxu0 %v1585
    %v1587 = vand.u32 %v656, 4294901760
    %1588 = vmatpush1.msra.mxu0 %v1587
    %v1589 = vand.u32 %v659, 4294901760
    %1590 = vmatprep.subr.mxu0 %v1589
    %v1591 = vand.u32 %v658, 4294901760
    %1592 = vmatpush1.msra.mxu0 %v1591
    %v1593 = vand.u32 %v661, 4294901760
    %1594 = vmatprep.subr.mxu0 %v1593
    %v1595 = vand.u32 %v660, 4294901760
    %1596 = vmatpush1.msra.mxu0 %v1595
    %v1597 = vand.u32 %v663, 4294901760
    %1598 = vmatprep.subr.mxu0 %v1597
    %v1599 = vand.u32 %v662, 4294901760
    %1600 = vmatpush1.msra.mxu0 %v1599
    %v1601 = vand.u32 %v665, 4294901760
    %1602 = vmatprep.subr.mxu0 %v1601
    %v1603 = vand.u32 %v664, 4294901760
    %1604 = vmatpush1.msra.mxu0 %v1603
    %v1605 = vand.u32 %v667, 4294901760
    %1606 = vmatprep.subr.mxu0 %v1605
    %v1607 = vand.u32 %v666, 4294901760
    %1608 = vmatpush1.msra.mxu0 %v1607
    %1609 = vmatprep.subr.mxu0 0.0
    %1610 = vmatpush1.msra.mxu0 0.0
    %1611 = vmatprep.subr.mxu0 0.0
    %1612 = vmatpush1.msra.mxu0 0.0
    %1613 = vmatprep.subr.mxu0 0.0
    %1614 = vmatpush1.msra.mxu0 0.0
    %1615 = vmatprep.subr.mxu0 0.0
    %1616 = vmatpush1.msra.mxu0 0.0
    %1617 = vmatprep.subr.mxu0 0.0
    %1618 = vmatpush1.msra.mxu0 0.0
    %1619 = vmatprep.subr.mxu0 0.0
    %1620 = vmatpush1.msra.mxu0 0.0
    %1621 = vmatprep.subr.mxu0 0.0
    %1622 = vmatpush1.msra.mxu0 0.0
    %1623 = vmatprep.subr.mxu0 0.0
    %1624 = vmatpush1.msra.mxu0 0.0
    %1625 = vmatprep.subr.mxu0 0.0
    %1626 = vmatpush1.msra.mxu0 0.0
    %1627 = vmatprep.subr.mxu0 0.0
    %1628 = vmatpush1.msra.mxu0 0.0
    %1629 = vmatprep.subr.mxu0 0.0
    %1630 = vmatpush1.msra.mxu0 0.0
    %1631 = vmatprep.subr.mxu0 0.0
    %1632 = vmatpush1.msra.mxu0 0.0
    %1633 = vmatprep.subr.mxu0 0.0
    %1634 = vmatpush1.msra.mxu0 0.0
    %1635 = vmatprep.subr.mxu0 0.0
    %1636 = vmatpush1.msra.mxu0 0.0
    %1637 = vmatprep.subr.mxu0 0.0
    %1638 = vmatpush1.msra.mxu0 0.0
    %1639 = vmatprep.subr.mxu0 0.0
    %1640 = vmatpush1.msra.mxu0 0.0
    %1641 = vmatprep.mubr.f32.mxu0 0.0
    %v1642 = vand.u32 %v615, 4294901760
    %1643 = vmatmul.mubr.f32.gmra.mrb[0].mxu0 %v1642
    %v1644 = vpop.f32.mrb[0].mxu0
    %v1645 = vadd.f32 %v1520, %v1644
    %v1646 = vpop.f32.mrb[0].mxu0
    %v1647 = vadd.f32 %v1522, %v1646
    %1648 = vmatprep.mubr.f32.mxu0 0.0
    %v1649 = vand.u32 %v621, 4294901760
    %1650 = vmatmul.mubr.f32.gmra.mrb[0].mxu0 %v1649
    %v1651 = vpop.f32.mrb[0].mxu0
    %v1652 = vadd.f32 %v1527, %v1651
    %v1653 = vpop.f32.mrb[0].mxu0
    %v1654 = vadd.f32 %v1529, %v1653
    %1655 = vmatprep.mubr.f32.mxu0 0.0
    %v1656 = vand.u32 %v627, 4294901760
    %1657 = vmatmul.mubr.f32.gmra.mrb[0].mxu0 %v1656
    %v1658 = vpop.f32.mrb[0].mxu0
    %v1659 = vadd.f32 %v1534, %v1658
    %v1660 = vpop.f32.mrb[0].mxu0
    %v1661 = vadd.f32 %v1536, %v1660
    %1662 = vmatprep.mubr.f32.mxu0 0.0
    %v1663 = vand.u32 %v633, 4294901760
    %1664 = vmatmul.mubr.f32.gmra.mrb[0].mxu0 %v1663
    %v1665 = vpop.f32.mrb[0].mxu0
    %v1666 = vadd.f32 %v1541, %v1665
    %v1667 = vpop.f32.mrb[0].mxu0
    %v1668 = vadd.f32 %v1543, %v1667
    %1669 = vdwg.mxu0
    %1670 = vst [vmem:[#allocation5] sm:$0xff] %v1645
    %1671 = vst [vmem:[#allocation5 + $0x8] sm:$0xff] %v1647
    %1672 = vst [vmem:[#allocation5 + $0x10] sm:$0xff] %v1652
    %1673 = vst [vmem:[#allocation5 + $0x18] sm:$0xff] %v1654
    %1674 = vst [vmem:[#allocation5 + $0x20] sm:$0xff] %v1659
    %1675 = vst [vmem:[#allocation5 + $0x28] sm:$0xff] %v1661
    %1676 = vst [vmem:[#allocation5 + $0x30] sm:$0xff] %v1666
    %1677 = vst [vmem:[#allocation5 + $0x38] sm:$0xff] %v1668
    // Predicated region
    $region18: #{tpu_custom_call.1} parent=1 // pred_check
      _
    $region19: #{tpu_custom_call.1} parent=1 // pred_check_branch
      %1679 = sbr.rel (0) target = $region21
    $region20: #{tpu_custom_call.1} parent=1 // pred_region
      %s1681 = ssub.s32 1024, 1024
      %1682 = vsyncadd [#allocation4], %s1681
      %s1683 = sshll.u32 [#allocation5], 4
      %s1684 = int_to_ptr.vmem [resolvable:$true] %s1683
      %1689 = dma.vmem_to_hbm [thread:$0]  %s1684, 1024, %s3, [#allocation4], 256, 256, 16
    $region21: #{tpu_custom_call.1} parent=1 // pred_fallthru
      _
    // Predicated region
    $region22: #{tpu_custom_call.1} parent=1 // pred_check
      _
    $region23: #{tpu_custom_call.1} parent=1 // pred_check_branch
      %1691 = sbr.rel (0) target = $region25
    $region24: #{tpu_custom_call.1} parent=1 // pred_region
      %1692 = dma.done [#allocation4], 1024
    $region25: #{tpu_custom_call.1} parent=1 // pred_fallthru
      _
    %1693 = vsyncpa [#allocation3], 1
    %1694 = vsyncpa [#allocation4], 1

</llo_original>
